<compile_context>
chip_gen: v7x
topology: tpu7x:2x2x1
jax: 0.10.0
libtpu: 0.0.40
codegen_flags: <defaults>
</compile_context>

<pallas_src>
import jax
import jax.numpy as jnp
from jax.experimental import pallas as pl
from jax.experimental.pallas import tpu as pltpu


def _round_up(x, m):
    return (x + m - 1) // m * m


def _sublane_granularity(dtype):
    return {4: 8, 2: 16, 1: 32}[jnp.dtype(dtype).itemsize]


def _vmem_limit_bytes():
    """Generation-aware scoped-VMEM limit (v7x: 64 MiB physical, v5e/v6e: 128 MiB)."""
    try:
        info = pltpu.get_tpu_info()
        cap = int(getattr(info, "vmem_capacity_bytes", 0)) or None
    except Exception:
        cap = None
    if cap is None:
        return 48 * 1024 * 1024          # unknown chip: safe on every generation
    if cap <= 64 * 1024 * 1024:          # v7x-class TensorCore
        return 40 * 1024 * 1024
    return 96 * 1024 * 1024              # v5e / v6e (128 MiB physical VMEM)


def _make_bblock_kernel(tile_h, KH, res_scale):
    """Kernel body for one (batch, row tile, width tile) grid step."""
    halo = KH - 1

    def kernel(xa_ref, xb_ref, wt_ref, b_ref, o_ref):
        # xa_ref : (1, 1, tile_h, band_pad)  main row block of this width window
        # xb_ref : (1, 1, g, band_pad)       g-row halo block just below it
        # wt_ref : (KH, band_pad, out_pad)   shared banded (Toeplitz) conv weights
        # b_ref  : (1, out_pad)              lane-dense bias (fp32)
        # o_ref  : (1, tile_h, out_pad)      lane-dense output tile
        xa = xa_ref[0, 0]
        if halo > 0:
            xw = jnp.concatenate([xa, xb_ref[0, 0, :halo]], axis=0)
        else:
            xw = xa

        # KH MXU matmuls; KW and Cin are folded into the contraction by the banded
        # weight, so the result leaves the MXU already lane-dense.  fp32 accumulate.
        # TODO(synk): fuse the KH dots into one deeper contraction (stack the
        # row-shifted windows along the band axis) to better fill the 256-deep MXU
        # on v6e/v7x and avoid the sublane-unaligned xw[kh:...] slice copies.
        acc = jnp.dot(xw[0:tile_h], wt_ref[0], preferred_element_type=jnp.float32)
        for kh in range(1, KH):
            acc = acc + jnp.dot(xw[kh:kh + tile_h], wt_ref[kh],
                                preferred_element_type=jnp.float32)

        acc = acc + b_ref[...]              # bias broadcast over rows, fp32
        acc = jnp.maximum(acc, 0.0)         # ReLU
        if res_scale != 1.0:                # static: skip the mul when scale == 1
            acc = acc * jnp.float32(res_scale)
        o_ref[0] = acc.astype(o_ref.dtype)

    return kernel


def _build_banded_weight(weight_oihw, tile_w, band_pad, out_pad, compute_dtype):
    """Shift-invariant per-width-tile Toeplitz weight.

    T[kh, (w+kw)*Cin + ci, w*Cout + co] = weight[co, ci, kh, kw], zero elsewhere.
    One block of shape (KH, band_pad, out_pad) is shared by every width tile.
    """
    Cout, Cin, KH, KW = weight_oihw.shape
    band = (tile_w + KW - 1) * Cin
    w_hwio = jnp.transpose(weight_oihw, (2, 3, 1, 0))        # (KH, KW, Cin, Cout)
    taps = w_hwio.reshape(KH, KW * Cin, Cout)
    j = jnp.arange(band)[:, None]                            # local input lane
    wv = jnp.arange(tile_w)[None, :]                         # local output column
    rel = j - wv * Cin                                       # (band, tile_w)
    valid = (rel >= 0) & (rel < KW * Cin)
    rel_c = jnp.clip(rel, 0, KW * Cin - 1)
    toe = taps[:, rel_c, :]                                  # (KH, band, tile_w, Cout)
    toe = jnp.where(valid[None, :, :, None], toe, 0.0)
    toe = toe.reshape(KH, band, tile_w * Cout)
    toe = jnp.pad(toe, ((0, 0), (0, band_pad - band), (0, out_pad - tile_w * Cout)))
    return toe.astype(compute_dtype)


def _auto_tile_w(W, Cin, Cout, KH, KW, itemsize, budget_bytes):
    """Largest divisor of W whose banded weight fits the budget; prefer lane-dense."""
    best, best_aligned = None, None
    for tw in range(1, W + 1):
        if W % tw:
            continue
        band_pad = _round_up((tw + KW - 1) * Cin, 128)
        out_pad = _round_up(tw * Cout, 128)
        if KH * band_pad * out_pad * itemsize > budget_bytes:
            continue
        best = tw
        if (tw * Cout) % 128 == 0:
            best_aligned = tw
    return best_aligned or best or 1


def _auto_tile_h(H, g, band_pad, out_pad, in_bytes, out_bytes, w_bytes, budget_bytes):
    """Largest row tile (multiple of g, divides H, <=512) fitting the VMEM budget."""
    best = g
    for th in range(g, min(H, 512) + 1, g):
        if H % th:
            continue
        est = (2 * th * band_pad * in_bytes      # input row block, double-buffered
               + 2 * g * band_pad * in_bytes     # g-row halo block, double-buffered
               + 2 * w_bytes + 4 * out_pad       # banded weight (+bias), worst case
               + 2 * th * out_pad * out_bytes)   # output block, double-buffered
        if est <= budget_bytes:
            best = th
    return best


def bblock_forward(x_nchw, weight_oihw, bias, *, res_scale=1.0,
                   compute_dtype=jnp.bfloat16, out_dtype=None,
                   tile_h=None, tile_w=None):
    """BBlock forward: same-padding Conv2d + ReLU + res_scale, via Pallas.

    x_nchw      : (N, Cin, H, W)      float32 (PyTorch layout)
    weight_oihw : (Cout, Cin, KH, KW) float32
    bias        : (Cout,)             float32
    returns     : (N, Cout, H, W)     out_dtype (defaults to compute_dtype)
    """
    N, Cin, H, W = x_nchw.shape
    Cout, Cin_w, KH, KW = weight_oihw.shape
    assert Cin == Cin_w, "grouped conv not supported (BBlock uses a plain Conv2d)"
    assert KH % 2 == 1 and KW % 2 == 1, "same-padding BBlock conv uses odd kernels"
    ph, pw = KH // 2, KW // 2
    out_dtype = compute_dtype if out_dtype is None else out_dtype

    in_bytes = jnp.dtype(compute_dtype).itemsize
    out_bytes = jnp.dtype(out_dtype).itemsize
    g = _sublane_granularity(compute_dtype)
    # TODO(synk): support H / W that are not multiples of the tile constraints.
    assert H % g == 0, f"H must be a multiple of {g} for compute_dtype={compute_dtype}"
    assert g >= KH - 1, "kernel height too large for a single g-row halo block"

    vmem_limit = _vmem_limit_bytes()

    if tile_w is None:
        tile_w = _auto_tile_w(W, Cin, Cout, KH, KW, in_bytes, vmem_limit // 4)
    assert W % tile_w == 0, "tile_w must divide W"
    n_w_tiles = W // tile_w
    band = (tile_w + KW - 1) * Cin
    band_pad = _round_up(band, 128)
    out_lanes = tile_w * Cout
    out_pad = _round_up(out_lanes, 128)
    w_bytes = KH * band_pad * out_pad * in_bytes

    if tile_h is None:
        tile_h = _auto_tile_h(H, g, band_pad, out_pad, in_bytes, out_bytes, w_bytes,
                              int(vmem_limit * 0.6))
    assert tile_h % g == 0 and H % tile_h == 0, \
        "tile_h must be a multiple of the sublane granularity and divide H"
    n_row_tiles = H // tile_h
    rbt = tile_h // g                   # halo block-index stride along padded rows

    # ---- wrapper glue (plain JAX) -------------------------------------------
    # TODO(synk): in a full MWCNN keep activations in this lane-flattened NHWC
    # window layout end-to-end so the transpose/pad/gather below disappear.
    x_nhwc = jnp.transpose(x_nchw, (0, 2, 3, 1))                        # NCHW -> NHWC
    # Top pad = ph zero rows; bottom pad = g - ph zero rows (just enough for the
    # final g-row halo block).  Padded height = H + g.
    x_pad = jnp.pad(x_nhwc, ((0, 0), (ph, g - ph), (pw, pw), (0, 0)))
    h_pad = H + g
    # Overlapping width windows: each width tile keeps tile_w + KW - 1 columns.
    col_idx = (jnp.arange(n_w_tiles)[:, None] * tile_w
               + jnp.arange(tile_w + KW - 1)[None, :])                  # (nw, tw+KW-1)
    x_win = x_pad[:, :, col_idx, :]                         # (N, h_pad, nw, tw+KW-1, Cin)
    x_win = jnp.transpose(x_win, (0, 2, 1, 3, 4)).reshape(N, n_w_tiles, h_pad, band)
    x_win = jnp.pad(x_win, ((0, 0), (0, 0), (0, 0), (0, band_pad - band)))
    x_win = x_win.astype(compute_dtype)

    toe = _build_banded_weight(weight_oihw, tile_w, band_pad, out_pad, compute_dtype)
    b_wide = jnp.pad(jnp.tile(bias.astype(jnp.float32), (tile_w,)),
                     (0, out_pad - out_lanes)).reshape(1, out_pad)

    kernel = _make_bblock_kernel(tile_h, KH, float(res_scale))

    def run(single_buffer_consts):
        # Weight / bias have constant index_maps (fetched once, kept resident);
        # single-buffering them halves their VMEM footprint.
        const_kwargs = (dict(pipeline_mode=pl.Buffered(1))
                        if single_buffer_consts else {})
        grid_spec = pltpu.PrefetchScalarGridSpec(
            num_scalar_prefetch=0,
            grid=(N, n_row_tiles, n_w_tiles),
            in_specs=[
                # Main row block of width-window j for batch element n.
                pl.BlockSpec((1, 1, tile_h, band_pad),
                             lambda n, i, j: (n, j, i, 0)),
                # g-row halo block just below it (always in bounds: bottom pad).
                pl.BlockSpec((1, 1, g, band_pad),
                             lambda n, i, j: (n, j, (i + 1) * rbt, 0)),
                # Shared banded weight / bias: constant index -> resident.
                pl.BlockSpec((KH, band_pad, out_pad),
                             lambda n, i, j: (0, 0, 0), **const_kwargs),
                pl.BlockSpec((1, out_pad),
                             lambda n, i, j: (0, 0), **const_kwargs),
            ],
            out_specs=pl.BlockSpec((1, tile_h, out_pad),
                                   lambda n, i, j: (n, i, j)),
        )
        return pl.pallas_call(
            kernel,
            out_shape=jax.ShapeDtypeStruct((N, H, n_w_tiles * out_pad), out_dtype),
            grid_spec=grid_spec,
            compiler_params=pltpu.CompilerParams(
                # All axes independent -> shardable across v7x's 2 TensorCores
                # (leading batch axis keeps both cores loaded).
                dimension_semantics=("parallel", "parallel", "parallel"),
                vmem_limit_bytes=vmem_limit,
            ),
        )(x_win, x_win, toe, b_wide)

    try:
        out_flat = run(True)
    except Exception:
        # TODO(synk): drop this fallback once pl.Buffered(1) on resident blocks is
        # confirmed across deployed jaxlib versions; semantics are identical.
        out_flat = run(False)

    out = out_flat.reshape(N, H, n_w_tiles, out_pad)[..., :out_lanes]
    out = out.reshape(N, H, W, Cout)
    return jnp.transpose(out, (0, 3, 1, 2))                 # NHWC -> NCHW


def _reference(x_nchw, weight_oihw, bias, res_scale):
    """Pure-JAX reference (lax conv) for correctness checking."""
    KH, KW = weight_oihw.shape[2], weight_oihw.shape[3]
    y = jax.lax.conv_general_dilated(
        x_nchw, weight_oihw,
        window_strides=(1, 1),
        padding=((KH // 2, KH // 2), (KW // 2, KW // 2)),
        dimension_numbers=("NCHW", "OIHW", "NCHW"),
    )
    y = y + bias.reshape(1, -1, 1, 1)
    return jnp.maximum(y, 0.0) * res_scale


if __name__ == "__main__":
    # Shapes consistent with BBlock(conv, in_channels=4, out_channels=8, kernel_size=3)
    N, Cin, Cout, H, W, K = 2, 4, 8, 16, 16, 3

    key = jax.random.PRNGKey(0)
    kx, kw, kb = jax.random.split(key, 3)
    x = jax.random.normal(kx, (N, Cin, H, W), dtype=jnp.float32)
    fan_in = Cin * K * K
    weight = jax.random.normal(kw, (Cout, Cin, K, K), dtype=jnp.float32) / jnp.sqrt(fan_in)
    bias = 0.1 * jax.random.normal(kb, (Cout,), dtype=jnp.float32)

    # 1) Default path: bf16 matmuls + bf16 output, auto tiles
    #    (tile_w=16 -> lane-dense 128-wide output, single width tile, tile_h=H).
    y_bf16 = jax.block_until_ready(bblock_forward(x, weight, bias, res_scale=1.0))
    y_ref1 = _reference(x, weight, bias, 1.0)
    assert y_bf16.shape == (N, Cout, H, W)
    tol = 5e-2 * (1.0 + float(jnp.max(jnp.abs(y_ref1))))
    err1 = float(jnp.max(jnp.abs(y_bf16.astype(jnp.float32) - y_ref1)))
    assert err1 < tol, f"bf16 path mismatch vs reference: {err1} >= {tol}"

    # 2) fp32 path with explicit small tiles: two row tiles (g-row halo), two width
    #    tiles (band 40->128 / out 64->128 lane padding + stripping), res_scale=0.5.
    y_f32 = jax.block_until_ready(
        bblock_forward(x, weight, bias, res_scale=0.5,
                       compute_dtype=jnp.float32, out_dtype=jnp.float32,
                       tile_h=8, tile_w=8))
    y_ref2 = _reference(x, weight, bias, 0.5)
    err2 = float(jnp.max(jnp.abs(y_f32 - y_ref2)))
    assert err2 < 1e-4, f"fp32 path mismatch vs reference: {err2}"

    print("KERNEL_OK")
</pallas_src>

<mosaic_0001>
module attributes {stable_mosaic.version = 11 : i64} {
  func.func @kernel(%arg0: i32, %arg1: i32, %arg2: i32, %arg3: memref<1x1x16x128xbf16, #tpu.memory_space<vmem>>, %arg4: memref<1x1x16x128xbf16, #tpu.memory_space<vmem>>, %arg5: memref<3x128x128xbf16, #tpu.memory_space<vmem>>, %arg6: memref<1x128xf32, #tpu.memory_space<vmem>>, %arg7: memref<1x16x128xbf16, #tpu.memory_space<vmem>>) attributes {dimension_semantics = [#tpu.dimension_semantics<parallel>, #tpu.dimension_semantics<parallel>, #tpu.dimension_semantics<parallel>], iteration_bounds = array<i64: 2, 1, 1>, scalar_prefetch = 0 : i64, scratch_operands = 0 : i64, tpu.core_type = #tpu.core_type<tc>, window_params = [{transform_indices = @transform_0, window_bounds = array<i64: 1, 1, 16, 128>}, {transform_indices = @transform_1, window_bounds = array<i64: 1, 1, 16, 128>}, {pipeline_mode = #tpu.pipeline_mode<synchronous>, transform_indices = @transform_2, window_bounds = array<i64: 3, 128, 128>}, {pipeline_mode = #tpu.pipeline_mode<synchronous>, transform_indices = @transform_3, window_bounds = array<i64: 1, 128>}, {transform_indices = @transform_4, window_bounds = array<i64: 1, 16, 128>}]} {
    %c0 = arith.constant 0 : index
    %c0_0 = arith.constant 0 : index
    %c0_1 = arith.constant 0 : index
    %c0_2 = arith.constant 0 : index
    %0 = vector.load %arg3[%c0, %c0_0, %c0_1, %c0_2] : memref<1x1x16x128xbf16, #tpu.memory_space<vmem>>, vector<1x1x16x128xbf16>
    %1 = vector.shape_cast %0 : vector<1x1x16x128xbf16> to vector<16x128xbf16>
    %c0_3 = arith.constant 0 : index
    %c0_4 = arith.constant 0 : index
    %c0_5 = arith.constant 0 : index
    %c0_6 = arith.constant 0 : index
    %2 = vector.load %arg4[%c0_3, %c0_4, %c0_5, %c0_6] : memref<1x1x16x128xbf16, #tpu.memory_space<vmem>>, vector<1x1x2x128xbf16>
    %3 = vector.shape_cast %2 : vector<1x1x2x128xbf16> to vector<2x128xbf16>
    %4 = tpu.concatenate %1, %3 in 0 : vector<16x128xbf16>, vector<2x128xbf16> -> vector<18x128xbf16>
    %5 = vector.extract_strided_slice %4 {offsets = [0, 0], sizes = [16, 128], strides = [1, 1]} : vector<18x128xbf16> to vector<16x128xbf16>
    %c0_7 = arith.constant 0 : index
    %c0_8 = arith.constant 0 : index
    %c0_9 = arith.constant 0 : index
    %6 = vector.load %arg5[%c0_7, %c0_8, %c0_9] : memref<3x128x128xbf16, #tpu.memory_space<vmem>>, vector<1x128x128xbf16>
    %7 = vector.shape_cast %6 : vector<1x128x128xbf16> to vector<128x128xbf16>
    %cst = arith.constant dense<0.000000e+00> : vector<16x128xf32>
    %8 = tpu.matmul %5, %7, %cst {dimension_numbers = #tpu.dot_dimension_numbers<[1], [0], [0], [1], [0, 0, 1, 1], [], []>} : vector<16x128xbf16>, vector<128x128xbf16>, vector<16x128xf32> -> vector<16x128xf32>
    %9 = vector.extract_strided_slice %4 {offsets = [1, 0], sizes = [16, 128], strides = [1, 1]} : vector<18x128xbf16> to vector<16x128xbf16>
    %c1 = arith.constant 1 : index
    %c0_10 = arith.constant 0 : index
    %c0_11 = arith.constant 0 : index
    %10 = vector.load %arg5[%c1, %c0_10, %c0_11] : memref<3x128x128xbf16, #tpu.memory_space<vmem>>, vector<1x128x128xbf16>
    %11 = vector.shape_cast %10 : vector<1x128x128xbf16> to vector<128x128xbf16>
    %cst_12 = arith.constant dense<0.000000e+00> : vector<16x128xf32>
    %12 = tpu.matmul %9, %11, %cst_12 {dimension_numbers = #tpu.dot_dimension_numbers<[1], [0], [0], [1], [0, 0, 1, 1], [], []>} : vector<16x128xbf16>, vector<128x128xbf16>, vector<16x128xf32> -> vector<16x128xf32>
    %13 = arith.addf %8, %12 : vector<16x128xf32>
    %14 = vector.extract_strided_slice %4 {offsets = [2, 0], sizes = [16, 128], strides = [1, 1]} : vector<18x128xbf16> to vector<16x128xbf16>
    %c2 = arith.constant 2 : index
    %c0_13 = arith.constant 0 : index
    %c0_14 = arith.constant 0 : index
    %15 = vector.load %arg5[%c2, %c0_13, %c0_14] : memref<3x128x128xbf16, #tpu.memory_space<vmem>>, vector<1x128x128xbf16>
    %16 = vector.shape_cast %15 : vector<1x128x128xbf16> to vector<128x128xbf16>
    %cst_15 = arith.constant dense<0.000000e+00> : vector<16x128xf32>
    %17 = tpu.matmul %14, %16, %cst_15 {dimension_numbers = #tpu.dot_dimension_numbers<[1], [0], [0], [1], [0, 0, 1, 1], [], []>} : vector<16x128xbf16>, vector<128x128xbf16>, vector<16x128xf32> -> vector<16x128xf32>
    %18 = arith.addf %13, %17 : vector<16x128xf32>
    %c0_16 = arith.constant 0 : index
    %c0_17 = arith.constant 0 : index
    %19 = vector.load %arg6[%c0_16, %c0_17] : memref<1x128xf32, #tpu.memory_space<vmem>>, vector<1x128xf32>
    %20 = vector.broadcast %19 : vector<1x128xf32> to vector<16x128xf32>
    %21 = arith.addf %18, %20 : vector<16x128xf32>
    %cst_18 = arith.constant 0.000000e+00 : f32
    %22 = vector.broadcast %cst_18 : f32 to vector<16x128xf32>
    %23 = arith.maximumf %21, %22 : vector<16x128xf32>
    %24 = arith.truncf %23 : vector<16x128xf32> to vector<16x128xbf16>
    %c0_19 = arith.constant 0 : index
    %c0_20 = arith.constant 0 : index
    %c0_21 = arith.constant 0 : index
    %25 = vector.load %arg7[%c0_19, %c0_20, %c0_21] : memref<1x16x128xbf16, #tpu.memory_space<vmem>>, vector<1x16x128xbf16>
    %26 = vector.shape_cast %25 : vector<1x16x128xbf16> to vector<16x128xbf16>
    %27 = vector.shape_cast %24 : vector<16x128xbf16> to vector<1x16x128xbf16>
    tpu.vector_store %arg7[%c0_19, %c0_20, %c0_21], %27 {strides = array<i32>} : memref<1x16x128xbf16, #tpu.memory_space<vmem>>, vector<1x16x128xbf16>,
    return
  }
  func.func @transform_0(%arg0: i32, %arg1: i32, %arg2: i32) -> (i32, i32, i32, i32) {
    %c0_i32 = arith.constant 0 : i32
    %c0_i32_0 = arith.constant 0 : i32
    return %arg0, %arg2, %arg1, %c0_i32 : i32, i32, i32, i32
  }
  func.func @transform_1(%arg0: i32, %arg1: i32, %arg2: i32) -> (i32, i32, i32, i32) {
    %c1_i32 = arith.constant 1 : i32
    %0 = arith.addi %arg1, %c1_i32 : i32
    %c1_i32_0 = arith.constant 1 : i32
    %1 = arith.muli %0, %c1_i32_0 : i32
    %c0_i32 = arith.constant 0 : i32
    %c0_i32_1 = arith.constant 0 : i32
    return %arg0, %arg2, %1, %c0_i32 : i32, i32, i32, i32
  }
  func.func @transform_2(%arg0: i32, %arg1: i32, %arg2: i32) -> (i32, i32, i32) {
    %c0_i32 = arith.constant 0 : i32
    %c0_i32_0 = arith.constant 0 : i32
    %c0_i32_1 = arith.constant 0 : i32
    %c0_i32_2 = arith.constant 0 : i32
    return %c0_i32, %c0_i32_0, %c0_i32_1 : i32, i32, i32
  }
  func.func @transform_3(%arg0: i32, %arg1: i32, %arg2: i32) -> (i32, i32) {
    %c0_i32 = arith.constant 0 : i32
    %c0_i32_0 = arith.constant 0 : i32
    %c0_i32_1 = arith.constant 0 : i32
    return %c0_i32, %c0_i32_0 : i32, i32
  }
  func.func @transform_4(%arg0: i32, %arg1: i32, %arg2: i32) -> (i32, i32, i32) {
    %c0_i32 = arith.constant 0 : i32
    return %arg0, %arg1, %arg2 : i32, i32, i32
  }
}

module attributes {stable_mosaic.version = 11 : i64} {
  func.func @kernel(%arg0: i32, %arg1: i32, %arg2: i32, %arg3: memref<1x1x16x128xbf16, #tpu.memory_space<vmem>>, %arg4: memref<1x1x16x128xbf16, #tpu.memory_space<vmem>>, %arg5: memref<3x128x128xbf16, #tpu.memory_space<vmem>>, %arg6: memref<1x128xf32, #tpu.memory_space<vmem>>, %arg7: memref<1x16x128xbf16, #tpu.memory_space<vmem>>) attributes {dimension_semantics = [#tpu.dimension_semantics<parallel>, #tpu.dimension_semantics<parallel>, #tpu.dimension_semantics<parallel>], iteration_bounds = array<i64: 2, 1, 1>, scalar_prefetch = 0 : i64, scratch_operands = 0 : i64, tpu.core_type = #tpu.core_type<tc>, window_params = [{transform_indices = @transform_0, window_bounds = array<i64: 1, 1, 16, 128>}, {transform_indices = @transform_1, window_bounds = array<i64: 1, 1, 16, 128>}, {pipeline_mode = #tpu.pipeline_mode<synchronous>, transform_indices = @transform_2, window_bounds = array<i64: 3, 128, 128>}, {pipeline_mode = #tpu.pipeline_mode<synchronous>, transform_indices = @transform_3, window_bounds = array<i64: 1, 128>}, {transform_indices = @transform_4, window_bounds = array<i64: 1, 16, 128>}]} {
    %c0 = arith.constant 0 : index
    %c0_0 = arith.constant 0 : index
    %c0_1 = arith.constant 0 : index
    %c0_2 = arith.constant 0 : index
    %0 = vector.load %arg3[%c0, %c0_0, %c0_1, %c0_2] : memref<1x1x16x128xbf16, #tpu.memory_space<vmem>>, vector<1x1x16x128xbf16>
    %1 = vector.shape_cast %0 : vector<1x1x16x128xbf16> to vector<16x128xbf16>
    %c0_3 = arith.constant 0 : index
    %c0_4 = arith.constant 0 : index
    %c0_5 = arith.constant 0 : index
    %c0_6 = arith.constant 0 : index
    %2 = vector.load %arg4[%c0_3, %c0_4, %c0_5, %c0_6] : memref<1x1x16x128xbf16, #tpu.memory_space<vmem>>, vector<1x1x2x128xbf16>
    %3 = vector.shape_cast %2 : vector<1x1x2x128xbf16> to vector<2x128xbf16>
    %4 = tpu.concatenate %1, %3 in 0 : vector<16x128xbf16>, vector<2x128xbf16> -> vector<18x128xbf16>
    %5 = vector.extract_strided_slice %4 {offsets = [0, 0], sizes = [16, 128], strides = [1, 1]} : vector<18x128xbf16> to vector<16x128xbf16>
    %c0_7 = arith.constant 0 : index
    %c0_8 = arith.constant 0 : index
    %c0_9 = arith.constant 0 : index
    %6 = vector.load %arg5[%c0_7, %c0_8, %c0_9] : memref<3x128x128xbf16, #tpu.memory_space<vmem>>, vector<1x128x128xbf16>
    %7 = vector.shape_cast %6 : vector<1x128x128xbf16> to vector<128x128xbf16>
    %cst = arith.constant dense<0.000000e+00> : vector<16x128xf32>
    %8 = tpu.matmul %5, %7, %cst {dimension_numbers = #tpu.dot_dimension_numbers<[1], [0], [0], [1], [0, 0, 1, 1], [], []>} : vector<16x128xbf16>, vector<128x128xbf16>, vector<16x128xf32> -> vector<16x128xf32>
    %9 = vector.extract_strided_slice %4 {offsets = [1, 0], sizes = [16, 128], strides = [1, 1]} : vector<18x128xbf16> to vector<16x128xbf16>
    %c1 = arith.constant 1 : index
    %c0_10 = arith.constant 0 : index
    %c0_11 = arith.constant 0 : index
    %10 = vector.load %arg5[%c1, %c0_10, %c0_11] : memref<3x128x128xbf16, #tpu.memory_space<vmem>>, vector<1x128x128xbf16>
    %11 = vector.shape_cast %10 : vector<1x128x128xbf16> to vector<128x128xbf16>
    %cst_12 = arith.constant dense<0.000000e+00> : vector<16x128xf32>
    %12 = tpu.matmul %9, %11, %cst_12 {dimension_numbers = #tpu.dot_dimension_numbers<[1], [0], [0], [1], [0, 0, 1, 1], [], []>} : vector<16x128xbf16>, vector<128x128xbf16>, vector<16x128xf32> -> vector<16x128xf32>
    %13 = arith.addf %8, %12 : vector<16x128xf32>
    %14 = vector.extract_strided_slice %4 {offsets = [2, 0], sizes = [16, 128], strides = [1, 1]} : vector<18x128xbf16> to vector<16x128xbf16>
    %c2 = arith.constant 2 : index
    %c0_13 = arith.constant 0 : index
    %c0_14 = arith.constant 0 : index
    %15 = vector.load %arg5[%c2, %c0_13, %c0_14] : memref<3x128x128xbf16, #tpu.memory_space<vmem>>, vector<1x128x128xbf16>
    %16 = vector.shape_cast %15 : vector<1x128x128xbf16> to vector<128x128xbf16>
    %cst_15 = arith.constant dense<0.000000e+00> : vector<16x128xf32>
    %17 = tpu.matmul %14, %16, %cst_15 {dimension_numbers = #tpu.dot_dimension_numbers<[1], [0], [0], [1], [0, 0, 1, 1], [], []>} : vector<16x128xbf16>, vector<128x128xbf16>, vector<16x128xf32> -> vector<16x128xf32>
    %18 = arith.addf %13, %17 : vector<16x128xf32>
    %c0_16 = arith.constant 0 : index
    %c0_17 = arith.constant 0 : index
    %19 = vector.load %arg6[%c0_16, %c0_17] : memref<1x128xf32, #tpu.memory_space<vmem>>, vector<1x128xf32>
    %20 = vector.broadcast %19 : vector<1x128xf32> to vector<16x128xf32>
    %21 = arith.addf %18, %20 : vector<16x128xf32>
    %cst_18 = arith.constant 0.000000e+00 : f32
    %22 = vector.broadcast %cst_18 : f32 to vector<16x128xf32>
    %23 = arith.maximumf %21, %22 : vector<16x128xf32>
    %24 = arith.truncf %23 : vector<16x128xf32> to vector<16x128xbf16>
    %c0_19 = arith.constant 0 : index
    %c0_20 = arith.constant 0 : index
    %c0_21 = arith.constant 0 : index
    %25 = vector.load %arg7[%c0_19, %c0_20, %c0_21] : memref<1x16x128xbf16, #tpu.memory_space<vmem>>, vector<1x16x128xbf16>
    %26 = vector.shape_cast %25 : vector<1x16x128xbf16> to vector<16x128xbf16>
    %27 = vector.shape_cast %24 : vector<16x128xbf16> to vector<1x16x128xbf16>
    tpu.vector_store %arg7[%c0_19, %c0_20, %c0_21], %27 {strides = array<i32>} : memref<1x16x128xbf16, #tpu.memory_space<vmem>>, vector<1x16x128xbf16>,
    return
  }
  func.func @transform_0(%arg0: i32, %arg1: i32, %arg2: i32) -> (i32, i32, i32, i32) {
    %c0_i32 = arith.constant 0 : i32
    %c0_i32_0 = arith.constant 0 : i32
    return %arg0, %arg2, %arg1, %c0_i32 : i32, i32, i32, i32
  }
  func.func @transform_1(%arg0: i32, %arg1: i32, %arg2: i32) -> (i32, i32, i32, i32) {
    %c1_i32 = arith.constant 1 : i32
    %0 = arith.addi %arg1, %c1_i32 : i32
    %c1_i32_0 = arith.constant 1 : i32
    %1 = arith.muli %0, %c1_i32_0 : i32
    %c0_i32 = arith.constant 0 : i32
    %c0_i32_1 = arith.constant 0 : i32
    return %arg0, %arg2, %1, %c0_i32 : i32, i32, i32, i32
  }
  func.func @transform_2(%arg0: i32, %arg1: i32, %arg2: i32) -> (i32, i32, i32) {
    %c0_i32 = arith.constant 0 : i32
    %c0_i32_0 = arith.constant 0 : i32
    %c0_i32_1 = arith.constant 0 : i32
    %c0_i32_2 = arith.constant 0 : i32
    return %c0_i32, %c0_i32_0, %c0_i32_1 : i32, i32, i32
  }
  func.func @transform_3(%arg0: i32, %arg1: i32, %arg2: i32) -> (i32, i32) {
    %c0_i32 = arith.constant 0 : i32
    %c0_i32_0 = arith.constant 0 : i32
    %c0_i32_1 = arith.constant 0 : i32
    return %c0_i32, %c0_i32_0 : i32, i32
  }
  func.func @transform_4(%arg0: i32, %arg1: i32, %arg2: i32) -> (i32, i32, i32) {
    %c0_i32 = arith.constant 0 : i32
    return %arg0, %arg1, %arg2 : i32, i32, i32
  }
}

</mosaic_0001>

<llo_original>
// kernel: tpu_custom_call.1
$region0: #{tpu_custom_call.1}
  #allocation0 [shape = 'u32[]', space=smem, size = 0x4, offset = 0x4, fixed_abs, tag = 'smem constant byte address 0x4 - core index']
  #allocation1 [shape = 'u32[144,128]{1,0:T(1,128)}', space=vmem, size = 0x12000, scoped, tag = 'internal scratch']
  %s0 = inlined_call_operand.hbm [shape: bf16[2,1,32,128], index: 0, kind: input, shape index: {}]
  %s1 = inlined_call_operand.hbm [shape: bf16[2,1,32,128], index: 1, kind: input, shape index: {}]
  %s2 = inlined_call_operand.hbm [shape: bf16[3,128,128], index: 2, kind: input, shape index: {}]
  %s3 = inlined_call_operand.vmem [shape: f32[1,128], index: 3, kind: input, shape index: {}]
  %s4 = inlined_call_operand.hbm [shape: bf16[2,16,128], index: 4, kind: output, shape index: {}]
  %s5 = sld [smem:[#allocation0]]
  $region61: #{tpu_custom_call.1} parent=0
    _
  %s7 = ssub.s32 1, %s5
  %s8 = scalar_select 0, %s7, %s5
  $region1: #{tpu_custom_call.1} parent=0
    #allocation2 [shape = 'u8[8192]{0}', space=vmem, size = 0x2000, scoped, tag = 'input window, operand 0']
    #allocation3 [shape = 's32[2]{0}', space=sflag, size = 0x8, scoped, tag = 'scoped memory for tpu_custom_call.1']
    #allocation4 [shape = 's32[2]{0}', space=sflag, size = 0x8, scoped, tag = 'scoped memory for tpu_custom_call.1']
    #allocation5 [shape = 'u8[8192]{0}', space=vmem, size = 0x2000, scoped, tag = 'input window, operand 1']
    #allocation6 [shape = 's32[2]{0}', space=sflag, size = 0x8, scoped, tag = 'scoped memory for tpu_custom_call.1']
    #allocation7 [shape = 'u8[98304]{0}', space=vmem, size = 0x18000, scoped, tag = 'input window, operand 2, single buffered']
    #allocation8 [shape = 'u8[8192]{0}', space=vmem, size = 0x2000, scoped, tag = 'output window, operand 0']
    %9 = vsyncpa [#allocation3], 0
    %s10 = scalar_lea.sflag [#allocation3], 1
    %11 = vsyncpa %s10, 0
    %12 = vsyncpa [#allocation6], 0
    %s13 = scalar_lea.sflag [#allocation6], 1
    %14 = vsyncpa %s13, 0
    %15 = vsyncpa [#allocation4], 0
    %s16 = scalar_lea.sflag [#allocation4], 1
    %17 = vsyncpa %s16, 0
    loop: start=0, step=1, limit=4
    $region2: #{tpu_custom_call.1} parent=1 // loop_pre_header
      _
    $region3: #{tpu_custom_call.1} parent=1 // loop_header
      %s19 = sphi 0, %s23
      %p20 = scmp.ge.s32.totalorder %s19, 4
      %s26 = sphi 0, %s45
      %s27 = sphi 0, %s41
      %s28 = sphi 0, %s37
      %s29 = sphi 0, %s26
      %s30 = sphi 0, %s27
      %s31 = sphi 0, %s28
      %s32 = sphi 0, %s29
      %s33 = sphi 0, %s30
      %s34 = sphi 0, %s31
      %s52 = sphi 0, %s54
      %s55 = sphi 0, %s52
      %s56 = sphi 0, %s55
      %s72 = sphi 0, %s56
      %s84 = sphi 0, %s86
      %s87 = sphi 0, %s84
      %s88 = sphi 0, %s87
      %s104 = sphi 0, %s88
      %s108 = sphi 0, %s108
      %s110 = sphi 0, %s108
      %s111 = sphi 0, %s110
      %s125 = sphi 0, %s111
      %s129 = sphi 0, %s129
      %s131 = sphi 0, %s129
      %s132 = sphi 0, %s131
      %s146 = sphi 0, %s132
      %s156 = sphi 0, %s158
      %s159 = sphi 0, %s156
      %s160 = sphi 0, %s159
      %s176 = sphi 0, %s160
    $region4: #{tpu_custom_call.1} parent=1 // loop_header_branch
      %22 = sbr.rel (%p20) target = $region8
    $region5: #{tpu_custom_call.1} parent=1 // loop_body
      %s24 = ssub.s32 %s19, 1
      %s25 = ssub.s32 %s19, 2
      %s35 = sadd.s32 1, %s28
      %p36 = scmp.ge.s32.totalorder %s35, 1
      %s37 = scalar_select %p36, 0, %s35
      %s38 = sadd.s32 1, %s27
      %s39 = scalar_select %p36, %s38, %s27
      %p40 = scmp.ge.s32.totalorder %s39, 1
      %s41 = scalar_select %p40, 0, %s39
      %s42 = sadd.s32 1, %s26
      %s43 = scalar_select %p40, %s42, %s26
      %p44 = scmp.ge.s32.totalorder %s43, 2
      %s45 = scalar_select %p44, 0, %s43
      %s46 = ssub.s32 %s26, %s45
      %s47 = ssub.s32 %s28, %s37
      %s48 = sor.u32 %s46, %s47
      %s49 = ssub.s32 %s27, %s41
      %s50 = sor.u32 %s48, %s49
      %p51 = scmp.eq.s32.totalorder %s50, 0
      %s53 = sadd.s32 %s52, 1
      %s54 = scalar_select %p51, %s52, %s53
      %p57 = pneg %p51
      %p58 = scmp.eq.s32.totalorder %s19, 1
      %p59 = por %p57, %p58
      %p60 = scmp.ne.s32.totalorder %s52, %s55
      %p61 = scmp.eq.s32.totalorder %s19, 0
      %p62 = por %p60, %p61
      %p63 = scmp.ne.s32.totalorder %s52, %s55
      %p64 = scmp.eq.s32.totalorder %s24, 1
      %p65 = por %p63, %p64
      %p66 = scmp.ne.s32.totalorder %s55, %s56
      %p67 = scmp.eq.s32.totalorder %s24, 0
      %p68 = por %p66, %p67
      %p69 = scmp.ne.s32.totalorder %s55, %s56
      %p70 = scmp.eq.s32.totalorder %s25, 1
      %p71 = por %p69, %p70
      %p73 = scmp.ne.s32.totalorder %s56, %s72
      %p74 = scmp.eq.s32.totalorder %s25, 0
      %p75 = por %p73, %p74
      %s76 = sadd.s32 %s27, 1
      %s77 = sadd.s32 %s41, 1
      %s78 = ssub.s32 %s26, %s45
      %s79 = ssub.s32 %s28, %s37
      %s80 = sor.u32 %s78, %s79
      %s81 = ssub.s32 %s76, %s77
      %s82 = sor.u32 %s80, %s81
      %p83 = scmp.eq.s32.totalorder %s82, 0
      %s85 = sadd.s32 %s84, 1
      %s86 = scalar_select %p83, %s84, %s85
      %p89 = pneg %p83
      %p90 = scmp.eq.s32.totalorder %s19, 1
      %p91 = por %p89, %p90
      %p92 = scmp.ne.s32.totalorder %s84, %s87
      %p93 = scmp.eq.s32.totalorder %s19, 0
      %p94 = por %p92, %p93
      %p95 = scmp.ne.s32.totalorder %s84, %s87
      %p96 = scmp.eq.s32.totalorder %s24, 1
      %p97 = por %p95, %p96
      %p98 = scmp.ne.s32.totalorder %s87, %s88
      %p99 = scmp.eq.s32.totalorder %s24, 0
      %p100 = por %p98, %p99
      %p101 = scmp.ne.s32.totalorder %s87, %s88
      %p102 = scmp.eq.s32.totalorder %s25, 1
      %p103 = por %p101, %p102
      %p105 = scmp.ne.s32.totalorder %s88, %s104
      %p106 = scmp.eq.s32.totalorder %s25, 0
      %p107 = por %p105, %p106
      %s109 = sadd.s32 %s108, 1
      %p112 = scmp.eq.s32.totalorder %s19, 1
      %p113 = scmp.ne.s32.totalorder %s108, %s110
      %p114 = scmp.eq.s32.totalorder %s19, 0
      %p115 = por %p113, %p114
      %p116 = scmp.ne.s32.totalorder %s108, %s110
      %p117 = scmp.eq.s32.totalorder %s24, 1
      %p118 = por %p116, %p117
      %p119 = scmp.ne.s32.totalorder %s110, %s111
      %p120 = scmp.eq.s32.totalorder %s24, 0
      %p121 = por %p119, %p120
      %p122 = scmp.ne.s32.totalorder %s110, %s111
      %p123 = scmp.eq.s32.totalorder %s25, 1
      %p124 = por %p122, %p123
      %p126 = scmp.ne.s32.totalorder %s111, %s125
      %p127 = scmp.eq.s32.totalorder %s25, 0
      %p128 = por %p126, %p127
      %s130 = sadd.s32 %s129, 1
      %p133 = scmp.eq.s32.totalorder %s19, 1
      %p134 = scmp.ne.s32.totalorder %s129, %s131
      %p135 = scmp.eq.s32.totalorder %s19, 0
      %p136 = por %p134, %p135
      %p137 = scmp.ne.s32.totalorder %s129, %s131
      %p138 = scmp.eq.s32.totalorder %s24, 1
      %p139 = por %p137, %p138
      %p140 = scmp.ne.s32.totalorder %s131, %s132
      %p141 = scmp.eq.s32.totalorder %s24, 0
      %p142 = por %p140, %p141
      %p143 = scmp.ne.s32.totalorder %s131, %s132
      %p144 = scmp.eq.s32.totalorder %s25, 1
      %p145 = por %p143, %p144
      %p147 = scmp.ne.s32.totalorder %s132, %s146
      %p148 = scmp.eq.s32.totalorder %s25, 0
      %p149 = por %p147, %p148
      %s150 = ssub.s32 %s26, %s45
      %s151 = ssub.s32 %s27, %s41
      %s152 = sor.u32 %s150, %s151
      %s153 = ssub.s32 %s28, %s37
      %s154 = sor.u32 %s152, %s153
      %p155 = scmp.eq.s32.totalorder %s154, 0
      %s157 = sadd.s32 %s156, 1
      %s158 = scalar_select %p155, %s156, %s157
      %p161 = pneg %p155
      %p162 = scmp.eq.s32.totalorder %s19, 1
      %p163 = por %p161, %p162
      %p164 = scmp.ne.s32.totalorder %s156, %s159
      %p165 = scmp.eq.s32.totalorder %s19, 0
      %p166 = por %p164, %p165
      %p167 = scmp.ne.s32.totalorder %s156, %s159
      %p168 = scmp.eq.s32.totalorder %s24, 1
      %p169 = por %p167, %p168
      %p170 = scmp.ne.s32.totalorder %s159, %s160
      %p171 = scmp.eq.s32.totalorder %s24, 0
      %p172 = por %p170, %p171
      %p173 = scmp.ne.s32.totalorder %s159, %s160
      %p174 = scmp.eq.s32.totalorder %s25, 1
      %p175 = por %p173, %p174
      %p177 = scmp.ne.s32.totalorder %s160, %s176
      %p178 = scmp.eq.s32.totalorder %s25, 0
      %p179 = por %p177, %p178
      %p180 = scmp.le.s32.totalorder 1, %s19
      %p181 = scmp.lt.s32.totalorder %s19, 3
      %p182 = pnand %p180, %p181
      %p183 = pneg %p182
      // Predicated region
      $region9: #{tpu_custom_call.1} parent=5 // pred_check
        _
      $region10: #{tpu_custom_call.1} parent=5 // pred_check_branch
        %185 = sbr.rel (%p182) target = $region12
      $region11: #{tpu_custom_call.1} parent=5 // pred_region
        %s186 = ssub.s32 %s19, 1
        // Predicated region
        $region13: #{tpu_custom_call.1} parent=11 // pred_check
          %p187 = pneg %p121
        $region14: #{tpu_custom_call.1} parent=11 // pred_check_branch
          %189 = sbr.rel (%p187) target = $region16
        $region15: #{tpu_custom_call.1} parent=11 // pred_region
          %s191 = ssub.s32 3072, 3072
          %192 = vsyncadd [#allocation6], %s191
          %s193 = sshll.u32 [#allocation7], 4
          %s194 = int_to_ptr.vmem [resolvable:$true] %s193
          %199 = dma.hbm_to_vmem [thread:$0]  %s2, 3072, %s194, [#allocation6], 64, 64, 4
        $region16: #{tpu_custom_call.1} parent=11 // pred_fallthru
          _
        // Predicated region
        $region17: #{tpu_custom_call.1} parent=11 // pred_check
          %p200 = pneg %p142
        $region18: #{tpu_custom_call.1} parent=11 // pred_check_branch
          %202 = sbr.rel (%p200) target = $region20
        $region19: #{tpu_custom_call.1} parent=11 // pred_region
          _
        $region20: #{tpu_custom_call.1} parent=11 // pred_fallthru
          _
      $region12: #{tpu_custom_call.1} parent=5 // pred_fallthru
        _
      %p203 = scmp.lt.s32.totalorder %s19, 2
      // Predicated region
      $region21: #{tpu_custom_call.1} parent=5 // pred_check
        %p204 = pneg %p203
      $region22: #{tpu_custom_call.1} parent=5 // pred_check_branch
        %206 = sbr.rel (%p204) target = $region24
      $region23: #{tpu_custom_call.1} parent=5 // pred_region
        // Predicated region
        $region25: #{tpu_custom_call.1} parent=23 // pred_check
          %p207 = pneg %p62
        $region26: #{tpu_custom_call.1} parent=23 // pred_check_branch
          %209 = sbr.rel (%p207) target = $region28
        $region27: #{tpu_custom_call.1} parent=23 // pred_region
          %s210 = sand.u32 %s52, 1
          %s211 = scalar_lea.sflag [#allocation3], %s210
          %s212 = sand.u32 %s52, 1
          %s213 = smul.addr %s212, 8
          %s214 = scalar_lea.vmem [#allocation2], %s213
          %s215 = smul.u32 2, %s27
          %s217 = ssub.s32 128, 128
          %218 = vsyncadd %s211, %s217
          %s219 = smul.addr %s28, 4
          %s220 = sadd.s32 %s215, %s219
          %s221 = smul.addr %s26, 4
          %s222 = sadd.s32 %s220, %s221
          %s223 = smul.addr %s222, 64
          %s224 = scalar_lea.hbm %s0, %s223
          %s225 = sshll.u32 %s214, 4
          %s226 = int_to_ptr.vmem [resolvable:$true] %s225
          %231 = dma.hbm_to_vmem [thread:$0]  %s224, 128, %s226, %s211, 64, 64, 4
        $region28: #{tpu_custom_call.1} parent=23 // pred_fallthru
          _
        // Predicated region
        $region29: #{tpu_custom_call.1} parent=23 // pred_check
          %p232 = pneg %p94
        $region30: #{tpu_custom_call.1} parent=23 // pred_check_branch
          %234 = sbr.rel (%p232) target = $region32
        $region31: #{tpu_custom_call.1} parent=23 // pred_region
          %s235 = sand.u32 %s19, 1
          %s236 = scalar_lea.sflag [#allocation6], %s235
          %s237 = sand.u32 %s84, 1
          %s238 = smul.addr %s237, 8
          %s239 = scalar_lea.vmem [#allocation5], %s238
          %s240 = sadd.s32 %s27, 1
          %s241 = smul.u32 2, %s240
          %s243 = ssub.s32 128, 128
          %244 = vsyncadd %s236, %s243
          %s245 = smul.addr %s28, 4
          %s246 = sadd.s32 %s241, %s245
          %s247 = smul.addr %s26, 4
          %s248 = sadd.s32 %s246, %s247
          %s249 = smul.addr %s248, 64
          %s250 = scalar_lea.hbm %s1, %s249
          %s251 = sshll.u32 %s239, 4
          %s252 = int_to_ptr.vmem [resolvable:$true] %s251
          %257 = dma.hbm_to_vmem [thread:$0]  %s250, 128, %s252, %s236, 64, 64, 4
        $region32: #{tpu_custom_call.1} parent=23 // pred_fallthru
          _
      $region24: #{tpu_custom_call.1} parent=5 // pred_fallthru
        _
      %p258 = scmp.le.s32.totalorder 1, %s19
      %p259 = scmp.lt.s32.totalorder %s19, 3
      %p260 = pnand %p258, %p259
      %p261 = pneg %p260
      // Predicated region
      $region33: #{tpu_custom_call.1} parent=5 // pred_check
        _
      $region34: #{tpu_custom_call.1} parent=5 // pred_check_branch
        %263 = sbr.rel (%p260) target = $region36
      $region35: #{tpu_custom_call.1} parent=5 // pred_region
        %s264 = ssub.s32 %s19, 1
        %s265 = sand.u32 %s55, 1
        %s266 = scalar_lea.sflag [#allocation3], %s265
        %s267 = sand.u32 %s55, 1
        %s268 = smul.addr %s267, 8
        %s269 = scalar_lea.vmem [#allocation2], %s268
        // Predicated region
        $region37: #{tpu_custom_call.1} parent=35 // pred_check
          %p270 = pneg %p68
        $region38: #{tpu_custom_call.1} parent=35 // pred_check_branch
          %272 = sbr.rel (%p270) target = $region40
        $region39: #{tpu_custom_call.1} parent=35 // pred_region
          %273 = dma.done %s266, 128
        $region40: #{tpu_custom_call.1} parent=35 // pred_fallthru
          _
        %s274 = sand.u32 %s24, 1
        %s275 = scalar_lea.sflag [#allocation6], %s274
        %s276 = sand.u32 %s87, 1
        %s277 = smul.addr %s276, 8
        %s278 = scalar_lea.vmem [#allocation5], %s277
        // Predicated region
        $region41: #{tpu_custom_call.1} parent=35 // pred_check
          %p279 = pneg %p100
        $region42: #{tpu_custom_call.1} parent=35 // pred_check_branch
          %281 = sbr.rel (%p279) target = $region44
        $region43: #{tpu_custom_call.1} parent=35 // pred_region
          %282 = dma.done %s275, 128
        $region44: #{tpu_custom_call.1} parent=35 // pred_fallthru
          _
        // Predicated region
        $region45: #{tpu_custom_call.1} parent=35 // pred_check
          %p283 = pneg %p121
        $region46: #{tpu_custom_call.1} parent=35 // pred_check_branch
          %285 = sbr.rel (%p283) target = $region48
        $region47: #{tpu_custom_call.1} parent=35 // pred_region
          %286 = dma.done [#allocation6], 3072
        $region48: #{tpu_custom_call.1} parent=35 // pred_fallthru
          _
        %s287 = sand.u32 %s55, 1
        %s288 = scalar_lea.sflag [#allocation3], %s287
        %s289 = sand.u32 %s55, 1
        %s290 = smul.addr %s289, 8
        %s291 = scalar_lea.vmem [#allocation2], %s290
        %p292 = pneg %p68
        %p293 = pneg %p65
        %s294 = sand.u32 %s24, 1
        %s295 = scalar_lea.sflag [#allocation6], %s294
        %s296 = sand.u32 %s87, 1
        %s297 = smul.addr %s296, 8
        %s298 = scalar_lea.vmem [#allocation5], %s297
        %p299 = pneg %p100
        %p300 = pneg %p97
        %p301 = pneg %p121
        %p302 = pneg %p118
        %p303 = pneg %p142
        %p304 = pneg %p139
        %p305 = pneg %p172
        %p306 = pneg %p169
        %s307 = sand.u32 %s159, 1
        %s308 = scalar_lea.sflag [#allocation4], %s307
        %s309 = sand.u32 %s159, 1
        %s310 = smul.addr %s309, 8
        %s311 = scalar_lea.vmem [#allocation8], %s310
        %s312 = smul.u32 2, %s30
        %s313 = sadd.s32 %s30, 1
        %s314 = smul.u32 2, %s313
        %s315 = smul.u32 2, %s30
        %v317 = vld [vmem:[%s269] sm:$0xf]
        %v318 = vld [vmem:[%s269 + $0x4] sm:$0xf]
        %v319 = vld [vmem:[%s278] sm:$0x1]
        %v322 = vunpack.c.l.b16 %v317
        %v323 = vunpack.c.l.b16 %v318
        %v324 = vpack.c.b16 %v323, %v322
        %v326 = vld [vmem:[#allocation7] sm:$0xf]
        %v327 = vld [vmem:[#allocation7 + $0x4] sm:$0xf]
        %v328 = vld [vmem:[#allocation7 + $0x8] sm:$0xf]
        %v329 = vld [vmem:[#allocation7 + $0xc] sm:$0xf]
        %v330 = vld [vmem:[#allocation7 + $0x10] sm:$0xf]
        %v331 = vld [vmem:[#allocation7 + $0x14] sm:$0xf]
        %v332 = vld [vmem:[#allocation7 + $0x18] sm:$0xf]
        %v333 = vld [vmem:[#allocation7 + $0x1c] sm:$0xf]
        %v334 = vld [vmem:[#allocation7 + $0x20] sm:$0xf]
        %v335 = vld [vmem:[#allocation7 + $0x24] sm:$0xf]
        %v336 = vld [vmem:[#allocation7 + $0x28] sm:$0xf]
        %v337 = vld [vmem:[#allocation7 + $0x2c] sm:$0xf]
        %v338 = vld [vmem:[#allocation7 + $0x30] sm:$0xf]
        %v339 = vld [vmem:[#allocation7 + $0x34] sm:$0xf]
        %v340 = vld [vmem:[#allocation7 + $0x38] sm:$0xf]
        %v341 = vld [vmem:[#allocation7 + $0x3c] sm:$0xf]
        %s342 = scalar_lea.vmem [#allocation7], 64
        %v343 = vld [vmem:[%s342] sm:$0xf]
        %v344 = vld [vmem:[%s342 + $0x4] sm:$0xf]
        %v345 = vld [vmem:[%s342 + $0x8] sm:$0xf]
        %v346 = vld [vmem:[%s342 + $0xc] sm:$0xf]
        %v347 = vld [vmem:[%s342 + $0x10] sm:$0xf]
        %v348 = vld [vmem:[%s342 + $0x14] sm:$0xf]
        %v349 = vld [vmem:[%s342 + $0x18] sm:$0xf]
        %v350 = vld [vmem:[%s342 + $0x1c] sm:$0xf]
        %v351 = vld [vmem:[%s342 + $0x20] sm:$0xf]
        %v352 = vld [vmem:[%s342 + $0x24] sm:$0xf]
        %v353 = vld [vmem:[%s342 + $0x28] sm:$0xf]
        %v354 = vld [vmem:[%s342 + $0x2c] sm:$0xf]
        %v355 = vld [vmem:[%s342 + $0x30] sm:$0xf]
        %v356 = vld [vmem:[%s342 + $0x34] sm:$0xf]
        %v357 = vld [vmem:[%s342 + $0x38] sm:$0xf]
        %v358 = vld [vmem:[%s342 + $0x3c] sm:$0xf]
        %vm359 = vsmask.f32 7424
        %v361 = vshrl.u32 %v324, 16
        %v363 = vshll.u32 %v324, 16
        %v365 = vrot.slane %v363, 1
        %v366 = vor.u32 %v361, %v365
        %v368 = vshll.u32 %v319, 16
        %v370 = vrot.slane %v368, 1
        %v371 = vsel %vm359, %v366, %v370
        %v389 = vunpack.c.l.b16 %v343
        %v390 = vunpack.c.l.b16 %v344
        %v391 = vunpack.c.l.b16 %v345
        %v392 = vunpack.c.l.b16 %v346
        %v393 = vunpack.c.l.b16 %v347
        %v394 = vunpack.c.l.b16 %v348
        %v395 = vunpack.c.l.b16 %v349
        %v396 = vunpack.c.l.b16 %v350
        %v397 = vunpack.c.l.b16 %v351
        %v398 = vunpack.c.l.b16 %v352
        %v399 = vunpack.c.l.b16 %v353
        %v400 = vunpack.c.l.b16 %v354
        %v401 = vunpack.c.l.b16 %v355
        %v402 = vunpack.c.l.b16 %v356
        %v403 = vunpack.c.l.b16 %v357
        %v404 = vunpack.c.l.b16 %v358
        %v405 = vpack.c.b16 %v390, %v389
        %v406 = vpack.c.b16 %v392, %v391
        %v407 = vpack.c.b16 %v394, %v393
        %v408 = vpack.c.b16 %v396, %v395
        %v409 = vpack.c.b16 %v398, %v397
        %v410 = vpack.c.b16 %v400, %v399
        %v411 = vpack.c.b16 %v402, %v401
        %v412 = vpack.c.b16 %v404, %v403
        %421 = vmatprep.subr.bf16.mxu0 0
        %422 = vmatpush1.bf16.msra.mxu0 %v405
        %423 = vmatprep.subr.bf16.mxu0 0
        %424 = vmatpush1.bf16.msra.mxu0 %v406
        %425 = vmatprep.subr.bf16.mxu0 0
        %426 = vmatpush1.bf16.msra.mxu0 %v407
        %427 = vmatprep.subr.bf16.mxu0 0
        %428 = vmatpush1.bf16.msra.mxu0 %v408
        %429 = vmatprep.subr.bf16.mxu0 0
        %430 = vmatpush1.bf16.msra.mxu0 %v409
        %431 = vmatprep.subr.bf16.mxu0 0
        %432 = vmatpush1.bf16.msra.mxu0 %v410
        %433 = vmatprep.subr.bf16.mxu0 0
        %434 = vmatpush1.bf16.msra.mxu0 %v411
        %435 = vmatprep.subr.bf16.mxu0 0
        %436 = vmatpush1.bf16.msra.mxu0 %v412
        %437 = vmatprep.subr.bf16.mxu0 0
        %438 = vmatpush1.bf16.msra.mxu0 0
        %439 = vmatprep.subr.bf16.mxu0 0
        %440 = vmatpush1.bf16.msra.mxu0 0
        %441 = vmatprep.subr.bf16.mxu0 0
        %442 = vmatpush1.bf16.msra.mxu0 0
        %443 = vmatprep.subr.bf16.mxu0 0
        %444 = vmatpush1.bf16.msra.mxu0 0
        %445 = vmatprep.subr.bf16.mxu0 0
        %446 = vmatpush1.bf16.msra.mxu0 0
        %447 = vmatprep.subr.bf16.mxu0 0
        %448 = vmatpush1.bf16.msra.mxu0 0
        %449 = vmatprep.subr.bf16.mxu0 0
        %450 = vmatpush1.bf16.msra.mxu0 0
        %451 = vmatprep.subr.bf16.mxu0 0
        %452 = vmatpush1.bf16.msra.mxu0 0
        %453 = vmatprep.mubr.bf16.mxu0 0
        %454 = vmatmul.mubr.bf16.gmra.mrb[0].mxu0 %v371
        %v455 = vpop.f32.mrb[0].mxu0
        %v456 = vadd.f32 0.0, %v455
        %v457 = vpop.f32.mrb[0].mxu0
        %v458 = vpop.f32.mrb[0].mxu0
        %v459 = vadd.f32 0.0, %v458
        %v460 = vpop.f32.mrb[0].mxu0
        %461 = vdwg.mxu0
        %v478 = vunpack.c.l.b16 %v326
        %v479 = vunpack.c.l.b16 %v327
        %v480 = vunpack.c.l.b16 %v328
        %v481 = vunpack.c.l.b16 %v329
        %v482 = vunpack.c.l.b16 %v330
        %v483 = vunpack.c.l.b16 %v331
        %v484 = vunpack.c.l.b16 %v332
        %v485 = vunpack.c.l.b16 %v333
        %v486 = vunpack.c.l.b16 %v334
        %v487 = vunpack.c.l.b16 %v335
        %v488 = vunpack.c.l.b16 %v336
        %v489 = vunpack.c.l.b16 %v337
        %v490 = vunpack.c.l.b16 %v338
        %v491 = vunpack.c.l.b16 %v339
        %v492 = vunpack.c.l.b16 %v340
        %v493 = vunpack.c.l.b16 %v341
        %v494 = vpack.c.b16 %v479, %v478
        %v495 = vpack.c.b16 %v481, %v480
        %v496 = vpack.c.b16 %v483, %v482
        %v497 = vpack.c.b16 %v485, %v484
        %v498 = vpack.c.b16 %v487, %v486
        %v499 = vpack.c.b16 %v489, %v488
        %v500 = vpack.c.b16 %v491, %v490
        %v501 = vpack.c.b16 %v493, %v492
        %510 = vmatprep.subr.bf16.mxu0 0
        %511 = vmatpush1.bf16.msra.mxu0 %v494
        %512 = vmatprep.subr.bf16.mxu0 0
        %513 = vmatpush1.bf16.msra.mxu0 %v495
        %514 = vmatprep.subr.bf16.mxu0 0
        %515 = vmatpush1.bf16.msra.mxu0 %v496
        %516 = vmatprep.subr.bf16.mxu0 0
        %517 = vmatpush1.bf16.msra.mxu0 %v497
        %518 = vmatprep.subr.bf16.mxu0 0
        %519 = vmatpush1.bf16.msra.mxu0 %v498
        %520 = vmatprep.subr.bf16.mxu0 0
        %521 = vmatpush1.bf16.msra.mxu0 %v499
        %522 = vmatprep.subr.bf16.mxu0 0
        %523 = vmatpush1.bf16.msra.mxu0 %v500
        %524 = vmatprep.subr.bf16.mxu0 0
        %525 = vmatpush1.bf16.msra.mxu0 %v501
        %526 = vmatprep.subr.bf16.mxu0 0
        %527 = vmatpush1.bf16.msra.mxu0 0
        %528 = vmatprep.subr.bf16.mxu0 0
        %529 = vmatpush1.bf16.msra.mxu0 0
        %530 = vmatprep.subr.bf16.mxu0 0
        %531 = vmatpush1.bf16.msra.mxu0 0
        %532 = vmatprep.subr.bf16.mxu0 0
        %533 = vmatpush1.bf16.msra.mxu0 0
        %534 = vmatprep.subr.bf16.mxu0 0
        %535 = vmatpush1.bf16.msra.mxu0 0
        %536 = vmatprep.subr.bf16.mxu0 0
        %537 = vmatpush1.bf16.msra.mxu0 0
        %538 = vmatprep.subr.bf16.mxu0 0
        %539 = vmatpush1.bf16.msra.mxu0 0
        %540 = vmatprep.subr.bf16.mxu0 0
        %541 = vmatpush1.bf16.msra.mxu0 0
        %542 = vmatprep.mubr.bf16.mxu0 0
        %543 = vmatmul.mubr.bf16.gmra.mrb[0].mxu0 %v324
        %v544 = vpop.f32.mrb[0].mxu0
        %v545 = vadd.f32 %v456, %v544
        %v546 = vpop.f32.mrb[0].mxu0
        %v547 = vpop.f32.mrb[0].mxu0
        %v548 = vadd.f32 %v459, %v547
        %v549 = vpop.f32.mrb[0].mxu0
        %550 = vdwg.mxu0
        %s551 = scalar_lea.vmem [#allocation7], 128
        %v552 = vld [vmem:[%s551] sm:$0xf]
        %v553 = vld [vmem:[%s551 + $0x4] sm:$0xf]
        %v554 = vld [vmem:[%s551 + $0x8] sm:$0xf]
        %v555 = vld [vmem:[%s551 + $0xc] sm:$0xf]
        %v556 = vld [vmem:[%s551 + $0x10] sm:$0xf]
        %v557 = vld [vmem:[%s551 + $0x14] sm:$0xf]
        %v558 = vld [vmem:[%s551 + $0x18] sm:$0xf]
        %v559 = vld [vmem:[%s551 + $0x1c] sm:$0xf]
        %v560 = vld [vmem:[%s551 + $0x20] sm:$0xf]
        %v561 = vld [vmem:[%s551 + $0x24] sm:$0xf]
        %v562 = vld [vmem:[%s551 + $0x28] sm:$0xf]
        %v563 = vld [vmem:[%s551 + $0x2c] sm:$0xf]
        %v564 = vld [vmem:[%s551 + $0x30] sm:$0xf]
        %v565 = vld [vmem:[%s551 + $0x34] sm:$0xf]
        %v566 = vld [vmem:[%s551 + $0x38] sm:$0xf]
        %v567 = vld [vmem:[%s551 + $0x3c] sm:$0xf]
        %vm569 = vcmask 1046528
        %v570 = vrot.slane %v324, 1
        %v571 = vrot.slane %v319, 1
        %v572 = vsel %vm569, %v570, %v571
        %v590 = vunpack.c.l.b16 %v552
        %v591 = vunpack.c.l.b16 %v553
        %v592 = vunpack.c.l.b16 %v554
        %v593 = vunpack.c.l.b16 %v555
        %v594 = vunpack.c.l.b16 %v556
        %v595 = vunpack.c.l.b16 %v557
        %v596 = vunpack.c.l.b16 %v558
        %v597 = vunpack.c.l.b16 %v559
        %v598 = vunpack.c.l.b16 %v560
        %v599 = vunpack.c.l.b16 %v561
        %v600 = vunpack.c.l.b16 %v562
        %v601 = vunpack.c.l.b16 %v563
        %v602 = vunpack.c.l.b16 %v564
        %v603 = vunpack.c.l.b16 %v565
        %v604 = vunpack.c.l.b16 %v566
        %v605 = vunpack.c.l.b16 %v567
        %v606 = vpack.c.b16 %v591, %v590
        %v607 = vpack.c.b16 %v593, %v592
        %v608 = vpack.c.b16 %v595, %v594
        %v609 = vpack.c.b16 %v597, %v596
        %v610 = vpack.c.b16 %v599, %v598
        %v611 = vpack.c.b16 %v601, %v600
        %v612 = vpack.c.b16 %v603, %v602
        %v613 = vpack.c.b16 %v605, %v604
        %622 = vmatprep.subr.bf16.mxu0 0
        %623 = vmatpush1.bf16.msra.mxu0 %v606
        %624 = vmatprep.subr.bf16.mxu0 0
        %625 = vmatpush1.bf16.msra.mxu0 %v607
        %626 = vmatprep.subr.bf16.mxu0 0
        %627 = vmatpush1.bf16.msra.mxu0 %v608
        %628 = vmatprep.subr.bf16.mxu0 0
        %629 = vmatpush1.bf16.msra.mxu0 %v609
        %630 = vmatprep.subr.bf16.mxu0 0
        %631 = vmatpush1.bf16.msra.mxu0 %v610
        %632 = vmatprep.subr.bf16.mxu0 0
        %633 = vmatpush1.bf16.msra.mxu0 %v611
        %634 = vmatprep.subr.bf16.mxu0 0
        %635 = vmatpush1.bf16.msra.mxu0 %v612
        %636 = vmatprep.subr.bf16.mxu0 0
        %637 = vmatpush1.bf16.msra.mxu0 %v613
        %638 = vmatprep.subr.bf16.mxu0 0
        %639 = vmatpush1.bf16.msra.mxu0 0
        %640 = vmatprep.subr.bf16.mxu0 0
        %641 = vmatpush1.bf16.msra.mxu0 0
        %642 = vmatprep.subr.bf16.mxu0 0
        %643 = vmatpush1.bf16.msra.mxu0 0
        %644 = vmatprep.subr.bf16.mxu0 0
        %645 = vmatpush1.bf16.msra.mxu0 0
        %646 = vmatprep.subr.bf16.mxu0 0
        %647 = vmatpush1.bf16.msra.mxu0 0
        %648 = vmatprep.subr.bf16.mxu0 0
        %649 = vmatpush1.bf16.msra.mxu0 0
        %650 = vmatprep.subr.bf16.mxu0 0
        %651 = vmatpush1.bf16.msra.mxu0 0
        %652 = vmatprep.subr.bf16.mxu0 0
        %653 = vmatpush1.bf16.msra.mxu0 0
        %654 = vmatprep.mubr.bf16.mxu0 0
        %655 = vmatmul.mubr.bf16.gmra.mrb[0].mxu0 %v572
        %v656 = vpop.f32.mrb[0].mxu0
        %v657 = vadd.f32 0.0, %v656
        %v658 = vpop.f32.mrb[0].mxu0
        %v659 = vpop.f32.mrb[0].mxu0
        %v660 = vadd.f32 0.0, %v659
        %v661 = vpop.f32.mrb[0].mxu0
        %662 = vdwg.mxu0
        %v663 = vadd.f32 %v545, %v657
        %v664 = vadd.f32 %v548, %v660
        %v665 = vld [vmem:[%s3] sm:$0x1]
        %v667 = vlaneseq
        %v668 = vshrl.u32 %v667, 7
        %v669 = vsub.s32 0, %v668
        %v670 = vrot.slane %v665, %v669
        %v672 = vadd.f32 %v663, %v670
        %v673 = vadd.f32 %v664, %v670
        %v674 = vmax.f32 %v672, 0.0
        %v675 = vmax.f32 %v673, 0.0
        %v676 = vpack.c.bf16 %v675, %v674
        %v678 = vunpack.c.l.b16 %v676
        %v679 = vunpack.c.h.b16 %v676
        %v680 = vpack.c.b16 %v678, %v678
        %v681 = vpack.c.b16 %v679, %v679
        %684 = vst [vmem:[%s311] sm:$0xf] %v680
        %685 = vst [vmem:[%s311 + $0x4] sm:$0xf] %v681
        %s686 = sand.u32 %s159, 1
        %s687 = scalar_lea.sflag [#allocation4], %s686
        %s688 = sand.u32 %s159, 1
        %s689 = smul.addr %s688, 8
        %s690 = scalar_lea.vmem [#allocation8], %s689
        // Predicated region
        $region49: #{tpu_custom_call.1} parent=35 // pred_check
          %p691 = pneg %p169
        $region50: #{tpu_custom_call.1} parent=35 // pred_check_branch
          %693 = sbr.rel (%p691) target = $region52
        $region51: #{tpu_custom_call.1} parent=35 // pred_region
          %s694 = smul.u32 2, %s30
          %s696 = ssub.s32 128, 128
          %697 = vsyncadd %s687, %s696
          %s698 = sadd.s32 %s31, %s694
          %s699 = smul.addr %s29, 2
          %s700 = sadd.s32 %s698, %s699
          %s701 = smul.addr %s700, 64
          %s702 = scalar_lea.hbm %s4, %s701
          %s703 = sshll.u32 %s690, 4
          %s704 = int_to_ptr.vmem [resolvable:$true] %s703
          %709 = dma.vmem_to_hbm [thread:$0]  %s704, 128, %s702, %s687, 64, 64, 4
        $region52: #{tpu_custom_call.1} parent=35 // pred_fallthru
          _
      $region36: #{tpu_custom_call.1} parent=5 // pred_fallthru
        _
      %p710 = scmp.le.s32.totalorder 2, %s19
      // Predicated region
      $region53: #{tpu_custom_call.1} parent=5 // pred_check
        %p711 = pneg %p710
      $region54: #{tpu_custom_call.1} parent=5 // pred_check_branch
        %713 = sbr.rel (%p711) target = $region56
      $region55: #{tpu_custom_call.1} parent=5 // pred_region
        %s714 = ssub.s32 %s19, 2
        // Predicated region
        $region57: #{tpu_custom_call.1} parent=55 // pred_check
          %p715 = pneg %p175
        $region58: #{tpu_custom_call.1} parent=55 // pred_check_branch
          %717 = sbr.rel (%p715) target = $region60
        $region59: #{tpu_custom_call.1} parent=55 // pred_region
          %s718 = sand.u32 %s160, 1
          %s719 = scalar_lea.sflag [#allocation4], %s718
          %s720 = sand.u32 %s160, 1
          %s721 = smul.addr %s720, 8
          %s722 = scalar_lea.vmem [#allocation8], %s721
          %723 = dma.done %s719, 128
        $region60: #{tpu_custom_call.1} parent=55 // pred_fallthru
          _
      $region56: #{tpu_custom_call.1} parent=5 // pred_fallthru
        _
    $region6: #{tpu_custom_call.1} parent=1 // loop_footer
      %s23 = sadd.s32 1, %s19
    $region7: #{tpu_custom_call.1} parent=1 // loop_footer_branch
      %18 = sbr.rel target = $region3
    $region8: #{tpu_custom_call.1} parent=1 // loop_exit
      _
    %724 = vsyncpa [#allocation3], 1
    %s725 = scalar_lea.sflag [#allocation3], 1
    %726 = vsyncpa %s725, 1
    %727 = vsyncpa [#allocation6], 1
    %s728 = scalar_lea.sflag [#allocation6], 1
    %729 = vsyncpa %s728, 1
    %730 = vsyncpa [#allocation4], 1
    %s731 = scalar_lea.sflag [#allocation4], 1
    %732 = vsyncpa %s731, 1

// kernel: tpu_custom_call.1
$region0: #{tpu_custom_call.1}
  #allocation0 [shape = 'u32[]', space=smem, size = 0x4, offset = 0x4, fixed_abs, tag = 'smem constant byte address 0x4 - core index']
  #allocation1 [shape = 'u32[144,128]{1,0:T(1,128)}', space=vmem, size = 0x12000, scoped, tag = 'internal scratch']
  %s0 = inlined_call_operand.hbm [shape: bf16[2,1,32,128], index: 0, kind: input, shape index: {}]
  %s1 = inlined_call_operand.hbm [shape: bf16[2,1,32,128], index: 1, kind: input, shape index: {}]
  %s2 = inlined_call_operand.hbm [shape: bf16[3,128,128], index: 2, kind: input, shape index: {}]
  %s3 = inlined_call_operand.vmem [shape: f32[1,128], index: 3, kind: input, shape index: {}]
  %s4 = inlined_call_operand.hbm [shape: bf16[2,16,128], index: 4, kind: output, shape index: {}]
  %s5 = sld [smem:[#allocation0]]
  $region61: #{tpu_custom_call.1} parent=0
    _
  %s7 = ssub.s32 1, %s5
  %s8 = scalar_select 0, %s7, %s5
  $region1: #{tpu_custom_call.1} parent=0
    #allocation2 [shape = 'u8[8192]{0}', space=vmem, size = 0x2000, scoped, tag = 'input window, operand 0']
    #allocation3 [shape = 's32[2]{0}', space=sflag, size = 0x8, scoped, tag = 'scoped memory for tpu_custom_call.1']
    #allocation4 [shape = 's32[2]{0}', space=sflag, size = 0x8, scoped, tag = 'scoped memory for tpu_custom_call.1']
    #allocation5 [shape = 'u8[8192]{0}', space=vmem, size = 0x2000, scoped, tag = 'input window, operand 1']
    #allocation6 [shape = 's32[2]{0}', space=sflag, size = 0x8, scoped, tag = 'scoped memory for tpu_custom_call.1']
    #allocation7 [shape = 'u8[98304]{0}', space=vmem, size = 0x18000, scoped, tag = 'input window, operand 2, single buffered']
    #allocation8 [shape = 'u8[8192]{0}', space=vmem, size = 0x2000, scoped, tag = 'output window, operand 0']
    %9 = vsyncpa [#allocation3], 0
    %s10 = scalar_lea.sflag [#allocation3], 1
    %11 = vsyncpa %s10, 0
    %12 = vsyncpa [#allocation6], 0
    %s13 = scalar_lea.sflag [#allocation6], 1
    %14 = vsyncpa %s13, 0
    %15 = vsyncpa [#allocation4], 0
    %s16 = scalar_lea.sflag [#allocation4], 1
    %17 = vsyncpa %s16, 0
    loop: start=0, step=1, limit=4
    $region2: #{tpu_custom_call.1} parent=1 // loop_pre_header
      _
    $region3: #{tpu_custom_call.1} parent=1 // loop_header
      %s19 = sphi 0, %s23
      %p20 = scmp.ge.s32.totalorder %s19, 4
      %s26 = sphi 0, %s45
      %s27 = sphi 0, %s41
      %s28 = sphi 0, %s37
      %s29 = sphi 0, %s26
      %s30 = sphi 0, %s27
      %s31 = sphi 0, %s28
      %s32 = sphi 0, %s29
      %s33 = sphi 0, %s30
      %s34 = sphi 0, %s31
      %s52 = sphi 0, %s54
      %s55 = sphi 0, %s52
      %s56 = sphi 0, %s55
      %s72 = sphi 0, %s56
      %s84 = sphi 0, %s86
      %s87 = sphi 0, %s84
      %s88 = sphi 0, %s87
      %s104 = sphi 0, %s88
      %s108 = sphi 0, %s108
      %s110 = sphi 0, %s108
      %s111 = sphi 0, %s110
      %s125 = sphi 0, %s111
      %s129 = sphi 0, %s129
      %s131 = sphi 0, %s129
      %s132 = sphi 0, %s131
      %s146 = sphi 0, %s132
      %s156 = sphi 0, %s158
      %s159 = sphi 0, %s156
      %s160 = sphi 0, %s159
      %s176 = sphi 0, %s160
    $region4: #{tpu_custom_call.1} parent=1 // loop_header_branch
      %22 = sbr.rel (%p20) target = $region8
    $region5: #{tpu_custom_call.1} parent=1 // loop_body
      %s24 = ssub.s32 %s19, 1
      %s25 = ssub.s32 %s19, 2
      %s35 = sadd.s32 1, %s28
      %p36 = scmp.ge.s32.totalorder %s35, 1
      %s37 = scalar_select %p36, 0, %s35
      %s38 = sadd.s32 1, %s27
      %s39 = scalar_select %p36, %s38, %s27
      %p40 = scmp.ge.s32.totalorder %s39, 1
      %s41 = scalar_select %p40, 0, %s39
      %s42 = sadd.s32 1, %s26
      %s43 = scalar_select %p40, %s42, %s26
      %p44 = scmp.ge.s32.totalorder %s43, 2
      %s45 = scalar_select %p44, 0, %s43
      %s46 = ssub.s32 %s26, %s45
      %s47 = ssub.s32 %s28, %s37
      %s48 = sor.u32 %s46, %s47
      %s49 = ssub.s32 %s27, %s41
      %s50 = sor.u32 %s48, %s49
      %p51 = scmp.eq.s32.totalorder %s50, 0
      %s53 = sadd.s32 %s52, 1
      %s54 = scalar_select %p51, %s52, %s53
      %p57 = pneg %p51
      %p58 = scmp.eq.s32.totalorder %s19, 1
      %p59 = por %p57, %p58
      %p60 = scmp.ne.s32.totalorder %s52, %s55
      %p61 = scmp.eq.s32.totalorder %s19, 0
      %p62 = por %p60, %p61
      %p63 = scmp.ne.s32.totalorder %s52, %s55
      %p64 = scmp.eq.s32.totalorder %s24, 1
      %p65 = por %p63, %p64
      %p66 = scmp.ne.s32.totalorder %s55, %s56
      %p67 = scmp.eq.s32.totalorder %s24, 0
      %p68 = por %p66, %p67
      %p69 = scmp.ne.s32.totalorder %s55, %s56
      %p70 = scmp.eq.s32.totalorder %s25, 1
      %p71 = por %p69, %p70
      %p73 = scmp.ne.s32.totalorder %s56, %s72
      %p74 = scmp.eq.s32.totalorder %s25, 0
      %p75 = por %p73, %p74
      %s76 = sadd.s32 %s27, 1
      %s77 = sadd.s32 %s41, 1
      %s78 = ssub.s32 %s26, %s45
      %s79 = ssub.s32 %s28, %s37
      %s80 = sor.u32 %s78, %s79
      %s81 = ssub.s32 %s76, %s77
      %s82 = sor.u32 %s80, %s81
      %p83 = scmp.eq.s32.totalorder %s82, 0
      %s85 = sadd.s32 %s84, 1
      %s86 = scalar_select %p83, %s84, %s85
      %p89 = pneg %p83
      %p90 = scmp.eq.s32.totalorder %s19, 1
      %p91 = por %p89, %p90
      %p92 = scmp.ne.s32.totalorder %s84, %s87
      %p93 = scmp.eq.s32.totalorder %s19, 0
      %p94 = por %p92, %p93
      %p95 = scmp.ne.s32.totalorder %s84, %s87
      %p96 = scmp.eq.s32.totalorder %s24, 1
      %p97 = por %p95, %p96
      %p98 = scmp.ne.s32.totalorder %s87, %s88
      %p99 = scmp.eq.s32.totalorder %s24, 0
      %p100 = por %p98, %p99
      %p101 = scmp.ne.s32.totalorder %s87, %s88
      %p102 = scmp.eq.s32.totalorder %s25, 1
      %p103 = por %p101, %p102
      %p105 = scmp.ne.s32.totalorder %s88, %s104
      %p106 = scmp.eq.s32.totalorder %s25, 0
      %p107 = por %p105, %p106
      %s109 = sadd.s32 %s108, 1
      %p112 = scmp.eq.s32.totalorder %s19, 1
      %p113 = scmp.ne.s32.totalorder %s108, %s110
      %p114 = scmp.eq.s32.totalorder %s19, 0
      %p115 = por %p113, %p114
      %p116 = scmp.ne.s32.totalorder %s108, %s110
      %p117 = scmp.eq.s32.totalorder %s24, 1
      %p118 = por %p116, %p117
      %p119 = scmp.ne.s32.totalorder %s110, %s111
      %p120 = scmp.eq.s32.totalorder %s24, 0
      %p121 = por %p119, %p120
      %p122 = scmp.ne.s32.totalorder %s110, %s111
      %p123 = scmp.eq.s32.totalorder %s25, 1
      %p124 = por %p122, %p123
      %p126 = scmp.ne.s32.totalorder %s111, %s125
      %p127 = scmp.eq.s32.totalorder %s25, 0
      %p128 = por %p126, %p127
      %s130 = sadd.s32 %s129, 1
      %p133 = scmp.eq.s32.totalorder %s19, 1
      %p134 = scmp.ne.s32.totalorder %s129, %s131
      %p135 = scmp.eq.s32.totalorder %s19, 0
      %p136 = por %p134, %p135
      %p137 = scmp.ne.s32.totalorder %s129, %s131
      %p138 = scmp.eq.s32.totalorder %s24, 1
      %p139 = por %p137, %p138
      %p140 = scmp.ne.s32.totalorder %s131, %s132
      %p141 = scmp.eq.s32.totalorder %s24, 0
      %p142 = por %p140, %p141
      %p143 = scmp.ne.s32.totalorder %s131, %s132
      %p144 = scmp.eq.s32.totalorder %s25, 1
      %p145 = por %p143, %p144
      %p147 = scmp.ne.s32.totalorder %s132, %s146
      %p148 = scmp.eq.s32.totalorder %s25, 0
      %p149 = por %p147, %p148
      %s150 = ssub.s32 %s26, %s45
      %s151 = ssub.s32 %s27, %s41
      %s152 = sor.u32 %s150, %s151
      %s153 = ssub.s32 %s28, %s37
      %s154 = sor.u32 %s152, %s153
      %p155 = scmp.eq.s32.totalorder %s154, 0
      %s157 = sadd.s32 %s156, 1
      %s158 = scalar_select %p155, %s156, %s157
      %p161 = pneg %p155
      %p162 = scmp.eq.s32.totalorder %s19, 1
      %p163 = por %p161, %p162
      %p164 = scmp.ne.s32.totalorder %s156, %s159
      %p165 = scmp.eq.s32.totalorder %s19, 0
      %p166 = por %p164, %p165
      %p167 = scmp.ne.s32.totalorder %s156, %s159
      %p168 = scmp.eq.s32.totalorder %s24, 1
      %p169 = por %p167, %p168
      %p170 = scmp.ne.s32.totalorder %s159, %s160
      %p171 = scmp.eq.s32.totalorder %s24, 0
      %p172 = por %p170, %p171
      %p173 = scmp.ne.s32.totalorder %s159, %s160
      %p174 = scmp.eq.s32.totalorder %s25, 1
      %p175 = por %p173, %p174
      %p177 = scmp.ne.s32.totalorder %s160, %s176
      %p178 = scmp.eq.s32.totalorder %s25, 0
      %p179 = por %p177, %p178
      %p180 = scmp.le.s32.totalorder 1, %s19
      %p181 = scmp.lt.s32.totalorder %s19, 3
      %p182 = pnand %p180, %p181
      %p183 = pneg %p182
      // Predicated region
      $region9: #{tpu_custom_call.1} parent=5 // pred_check
        _
      $region10: #{tpu_custom_call.1} parent=5 // pred_check_branch
        %185 = sbr.rel (%p182) target = $region12
      $region11: #{tpu_custom_call.1} parent=5 // pred_region
        %s186 = ssub.s32 %s19, 1
        // Predicated region
        $region13: #{tpu_custom_call.1} parent=11 // pred_check
          %p187 = pneg %p121
        $region14: #{tpu_custom_call.1} parent=11 // pred_check_branch
          %189 = sbr.rel (%p187) target = $region16
        $region15: #{tpu_custom_call.1} parent=11 // pred_region
          %s191 = ssub.s32 3072, 3072
          %192 = vsyncadd [#allocation6], %s191
          %s193 = sshll.u32 [#allocation7], 4
          %s194 = int_to_ptr.vmem [resolvable:$true] %s193
          %199 = dma.hbm_to_vmem [thread:$0]  %s2, 3072, %s194, [#allocation6], 64, 64, 4
        $region16: #{tpu_custom_call.1} parent=11 // pred_fallthru
          _
        // Predicated region
        $region17: #{tpu_custom_call.1} parent=11 // pred_check
          %p200 = pneg %p142
        $region18: #{tpu_custom_call.1} parent=11 // pred_check_branch
          %202 = sbr.rel (%p200) target = $region20
        $region19: #{tpu_custom_call.1} parent=11 // pred_region
          _
        $region20: #{tpu_custom_call.1} parent=11 // pred_fallthru
          _
      $region12: #{tpu_custom_call.1} parent=5 // pred_fallthru
        _
      %p203 = scmp.lt.s32.totalorder %s19, 2
      // Predicated region
      $region21: #{tpu_custom_call.1} parent=5 // pred_check
        %p204 = pneg %p203
      $region22: #{tpu_custom_call.1} parent=5 // pred_check_branch
        %206 = sbr.rel (%p204) target = $region24
      $region23: #{tpu_custom_call.1} parent=5 // pred_region
        // Predicated region
        $region25: #{tpu_custom_call.1} parent=23 // pred_check
          %p207 = pneg %p62
        $region26: #{tpu_custom_call.1} parent=23 // pred_check_branch
          %209 = sbr.rel (%p207) target = $region28
        $region27: #{tpu_custom_call.1} parent=23 // pred_region
          %s210 = sand.u32 %s52, 1
          %s211 = scalar_lea.sflag [#allocation3], %s210
          %s212 = sand.u32 %s52, 1
          %s213 = smul.addr %s212, 8
          %s214 = scalar_lea.vmem [#allocation2], %s213
          %s215 = smul.u32 2, %s27
          %s217 = ssub.s32 128, 128
          %218 = vsyncadd %s211, %s217
          %s219 = smul.addr %s28, 4
          %s220 = sadd.s32 %s215, %s219
          %s221 = smul.addr %s26, 4
          %s222 = sadd.s32 %s220, %s221
          %s223 = smul.addr %s222, 64
          %s224 = scalar_lea.hbm %s0, %s223
          %s225 = sshll.u32 %s214, 4
          %s226 = int_to_ptr.vmem [resolvable:$true] %s225
          %231 = dma.hbm_to_vmem [thread:$0]  %s224, 128, %s226, %s211, 64, 64, 4
        $region28: #{tpu_custom_call.1} parent=23 // pred_fallthru
          _
        // Predicated region
        $region29: #{tpu_custom_call.1} parent=23 // pred_check
          %p232 = pneg %p94
        $region30: #{tpu_custom_call.1} parent=23 // pred_check_branch
          %234 = sbr.rel (%p232) target = $region32
        $region31: #{tpu_custom_call.1} parent=23 // pred_region
          %s235 = sand.u32 %s19, 1
          %s236 = scalar_lea.sflag [#allocation6], %s235
          %s237 = sand.u32 %s84, 1
          %s238 = smul.addr %s237, 8
          %s239 = scalar_lea.vmem [#allocation5], %s238
          %s240 = sadd.s32 %s27, 1
          %s241 = smul.u32 2, %s240
          %s243 = ssub.s32 128, 128
          %244 = vsyncadd %s236, %s243
          %s245 = smul.addr %s28, 4
          %s246 = sadd.s32 %s241, %s245
          %s247 = smul.addr %s26, 4
          %s248 = sadd.s32 %s246, %s247
          %s249 = smul.addr %s248, 64
          %s250 = scalar_lea.hbm %s1, %s249
          %s251 = sshll.u32 %s239, 4
          %s252 = int_to_ptr.vmem [resolvable:$true] %s251
          %257 = dma.hbm_to_vmem [thread:$0]  %s250, 128, %s252, %s236, 64, 64, 4
        $region32: #{tpu_custom_call.1} parent=23 // pred_fallthru
          _
      $region24: #{tpu_custom_call.1} parent=5 // pred_fallthru
        _
      %p258 = scmp.le.s32.totalorder 1, %s19
      %p259 = scmp.lt.s32.totalorder %s19, 3
      %p260 = pnand %p258, %p259
      %p261 = pneg %p260
      // Predicated region
      $region33: #{tpu_custom_call.1} parent=5 // pred_check
        _
      $region34: #{tpu_custom_call.1} parent=5 // pred_check_branch
        %263 = sbr.rel (%p260) target = $region36
      $region35: #{tpu_custom_call.1} parent=5 // pred_region
        %s264 = ssub.s32 %s19, 1
        %s265 = sand.u32 %s55, 1
        %s266 = scalar_lea.sflag [#allocation3], %s265
        %s267 = sand.u32 %s55, 1
        %s268 = smul.addr %s267, 8
        %s269 = scalar_lea.vmem [#allocation2], %s268
        // Predicated region
        $region37: #{tpu_custom_call.1} parent=35 // pred_check
          %p270 = pneg %p68
        $region38: #{tpu_custom_call.1} parent=35 // pred_check_branch
          %272 = sbr.rel (%p270) target = $region40
        $region39: #{tpu_custom_call.1} parent=35 // pred_region
          %273 = dma.done %s266, 128
        $region40: #{tpu_custom_call.1} parent=35 // pred_fallthru
          _
        %s274 = sand.u32 %s24, 1
        %s275 = scalar_lea.sflag [#allocation6], %s274
        %s276 = sand.u32 %s87, 1
        %s277 = smul.addr %s276, 8
        %s278 = scalar_lea.vmem [#allocation5], %s277
        // Predicated region
        $region41: #{tpu_custom_call.1} parent=35 // pred_check
          %p279 = pneg %p100
        $region42: #{tpu_custom_call.1} parent=35 // pred_check_branch
          %281 = sbr.rel (%p279) target = $region44
        $region43: #{tpu_custom_call.1} parent=35 // pred_region
          %282 = dma.done %s275, 128
        $region44: #{tpu_custom_call.1} parent=35 // pred_fallthru
          _
        // Predicated region
        $region45: #{tpu_custom_call.1} parent=35 // pred_check
          %p283 = pneg %p121
        $region46: #{tpu_custom_call.1} parent=35 // pred_check_branch
          %285 = sbr.rel (%p283) target = $region48
        $region47: #{tpu_custom_call.1} parent=35 // pred_region
          %286 = dma.done [#allocation6], 3072
        $region48: #{tpu_custom_call.1} parent=35 // pred_fallthru
          _
        %s287 = sand.u32 %s55, 1
        %s288 = scalar_lea.sflag [#allocation3], %s287
        %s289 = sand.u32 %s55, 1
        %s290 = smul.addr %s289, 8
        %s291 = scalar_lea.vmem [#allocation2], %s290
        %p292 = pneg %p68
        %p293 = pneg %p65
        %s294 = sand.u32 %s24, 1
        %s295 = scalar_lea.sflag [#allocation6], %s294
        %s296 = sand.u32 %s87, 1
        %s297 = smul.addr %s296, 8
        %s298 = scalar_lea.vmem [#allocation5], %s297
        %p299 = pneg %p100
        %p300 = pneg %p97
        %p301 = pneg %p121
        %p302 = pneg %p118
        %p303 = pneg %p142
        %p304 = pneg %p139
        %p305 = pneg %p172
        %p306 = pneg %p169
        %s307 = sand.u32 %s159, 1
        %s308 = scalar_lea.sflag [#allocation4], %s307
        %s309 = sand.u32 %s159, 1
        %s310 = smul.addr %s309, 8
        %s311 = scalar_lea.vmem [#allocation8], %s310
        %s312 = smul.u32 2, %s30
        %s313 = sadd.s32 %s30, 1
        %s314 = smul.u32 2, %s313
        %s315 = smul.u32 2, %s30
        %v317 = vld [vmem:[%s269] sm:$0xf]
        %v318 = vld [vmem:[%s269 + $0x4] sm:$0xf]
        %v319 = vld [vmem:[%s278] sm:$0x1]
        %v322 = vunpack.c.l.b16 %v317
        %v323 = vunpack.c.l.b16 %v318
        %v324 = vpack.c.b16 %v323, %v322
        %v326 = vld [vmem:[#allocation7] sm:$0xf]
        %v327 = vld [vmem:[#allocation7 + $0x4] sm:$0xf]
        %v328 = vld [vmem:[#allocation7 + $0x8] sm:$0xf]
        %v329 = vld [vmem:[#allocation7 + $0xc] sm:$0xf]
        %v330 = vld [vmem:[#allocation7 + $0x10] sm:$0xf]
        %v331 = vld [vmem:[#allocation7 + $0x14] sm:$0xf]
        %v332 = vld [vmem:[#allocation7 + $0x18] sm:$0xf]
        %v333 = vld [vmem:[#allocation7 + $0x1c] sm:$0xf]
        %v334 = vld [vmem:[#allocation7 + $0x20] sm:$0xf]
        %v335 = vld [vmem:[#allocation7 + $0x24] sm:$0xf]
        %v336 = vld [vmem:[#allocation7 + $0x28] sm:$0xf]
        %v337 = vld [vmem:[#allocation7 + $0x2c] sm:$0xf]
        %v338 = vld [vmem:[#allocation7 + $0x30] sm:$0xf]
        %v339 = vld [vmem:[#allocation7 + $0x34] sm:$0xf]
        %v340 = vld [vmem:[#allocation7 + $0x38] sm:$0xf]
        %v341 = vld [vmem:[#allocation7 + $0x3c] sm:$0xf]
        %s342 = scalar_lea.vmem [#allocation7], 64
        %v343 = vld [vmem:[%s342] sm:$0xf]
        %v344 = vld [vmem:[%s342 + $0x4] sm:$0xf]
        %v345 = vld [vmem:[%s342 + $0x8] sm:$0xf]
        %v346 = vld [vmem:[%s342 + $0xc] sm:$0xf]
        %v347 = vld [vmem:[%s342 + $0x10] sm:$0xf]
        %v348 = vld [vmem:[%s342 + $0x14] sm:$0xf]
        %v349 = vld [vmem:[%s342 + $0x18] sm:$0xf]
        %v350 = vld [vmem:[%s342 + $0x1c] sm:$0xf]
        %v351 = vld [vmem:[%s342 + $0x20] sm:$0xf]
        %v352 = vld [vmem:[%s342 + $0x24] sm:$0xf]
        %v353 = vld [vmem:[%s342 + $0x28] sm:$0xf]
        %v354 = vld [vmem:[%s342 + $0x2c] sm:$0xf]
        %v355 = vld [vmem:[%s342 + $0x30] sm:$0xf]
        %v356 = vld [vmem:[%s342 + $0x34] sm:$0xf]
        %v357 = vld [vmem:[%s342 + $0x38] sm:$0xf]
        %v358 = vld [vmem:[%s342 + $0x3c] sm:$0xf]
        %vm359 = vsmask.f32 7424
        %v361 = vshrl.u32 %v324, 16
        %v363 = vshll.u32 %v324, 16
        %v365 = vrot.slane %v363, 1
        %v366 = vor.u32 %v361, %v365
        %v368 = vshll.u32 %v319, 16
        %v370 = vrot.slane %v368, 1
        %v371 = vsel %vm359, %v366, %v370
        %v389 = vunpack.c.l.b16 %v343
        %v390 = vunpack.c.l.b16 %v344
        %v391 = vunpack.c.l.b16 %v345
        %v392 = vunpack.c.l.b16 %v346
        %v393 = vunpack.c.l.b16 %v347
        %v394 = vunpack.c.l.b16 %v348
        %v395 = vunpack.c.l.b16 %v349
        %v396 = vunpack.c.l.b16 %v350
        %v397 = vunpack.c.l.b16 %v351
        %v398 = vunpack.c.l.b16 %v352
        %v399 = vunpack.c.l.b16 %v353
        %v400 = vunpack.c.l.b16 %v354
        %v401 = vunpack.c.l.b16 %v355
        %v402 = vunpack.c.l.b16 %v356
        %v403 = vunpack.c.l.b16 %v357
        %v404 = vunpack.c.l.b16 %v358
        %v405 = vpack.c.b16 %v390, %v389
        %v406 = vpack.c.b16 %v392, %v391
        %v407 = vpack.c.b16 %v394, %v393
        %v408 = vpack.c.b16 %v396, %v395
        %v409 = vpack.c.b16 %v398, %v397
        %v410 = vpack.c.b16 %v400, %v399
        %v411 = vpack.c.b16 %v402, %v401
        %v412 = vpack.c.b16 %v404, %v403
        %421 = vmatprep.subr.bf16.mxu0 0
        %422 = vmatpush1.bf16.msra.mxu0 %v405
        %423 = vmatprep.subr.bf16.mxu0 0
        %424 = vmatpush1.bf16.msra.mxu0 %v406
        %425 = vmatprep.subr.bf16.mxu0 0
        %426 = vmatpush1.bf16.msra.mxu0 %v407
        %427 = vmatprep.subr.bf16.mxu0 0
        %428 = vmatpush1.bf16.msra.mxu0 %v408
        %429 = vmatprep.subr.bf16.mxu0 0
        %430 = vmatpush1.bf16.msra.mxu0 %v409
        %431 = vmatprep.subr.bf16.mxu0 0
        %432 = vmatpush1.bf16.msra.mxu0 %v410
        %433 = vmatprep.subr.bf16.mxu0 0
        %434 = vmatpush1.bf16.msra.mxu0 %v411
        %435 = vmatprep.subr.bf16.mxu0 0
        %436 = vmatpush1.bf16.msra.mxu0 %v412
        %437 = vmatprep.subr.bf16.mxu0 0
        %438 = vmatpush1.bf16.msra.mxu0 0
        %439 = vmatprep.subr.bf16.mxu0 0
        %440 = vmatpush1.bf16.msra.mxu0 0
        %441 = vmatprep.subr.bf16.mxu0 0
        %442 = vmatpush1.bf16.msra.mxu0 0
        %443 = vmatprep.subr.bf16.mxu0 0
        %444 = vmatpush1.bf16.msra.mxu0 0
        %445 = vmatprep.subr.bf16.mxu0 0
        %446 = vmatpush1.bf16.msra.mxu0 0
        %447 = vmatprep.subr.bf16.mxu0 0
        %448 = vmatpush1.bf16.msra.mxu0 0
        %449 = vmatprep.subr.bf16.mxu0 0
        %450 = vmatpush1.bf16.msra.mxu0 0
        %451 = vmatprep.subr.bf16.mxu0 0
        %452 = vmatpush1.bf16.msra.mxu0 0
        %453 = vmatprep.mubr.bf16.mxu0 0
        %454 = vmatmul.mubr.bf16.gmra.mrb[0].mxu0 %v371
        %v455 = vpop.f32.mrb[0].mxu0
        %v456 = vadd.f32 0.0, %v455
        %v457 = vpop.f32.mrb[0].mxu0
        %v458 = vpop.f32.mrb[0].mxu0
        %v459 = vadd.f32 0.0, %v458
        %v460 = vpop.f32.mrb[0].mxu0
        %461 = vdwg.mxu0
        %v478 = vunpack.c.l.b16 %v326
        %v479 = vunpack.c.l.b16 %v327
        %v480 = vunpack.c.l.b16 %v328
        %v481 = vunpack.c.l.b16 %v329
        %v482 = vunpack.c.l.b16 %v330
        %v483 = vunpack.c.l.b16 %v331
        %v484 = vunpack.c.l.b16 %v332
        %v485 = vunpack.c.l.b16 %v333
        %v486 = vunpack.c.l.b16 %v334
        %v487 = vunpack.c.l.b16 %v335
        %v488 = vunpack.c.l.b16 %v336
        %v489 = vunpack.c.l.b16 %v337
        %v490 = vunpack.c.l.b16 %v338
        %v491 = vunpack.c.l.b16 %v339
        %v492 = vunpack.c.l.b16 %v340
        %v493 = vunpack.c.l.b16 %v341
        %v494 = vpack.c.b16 %v479, %v478
        %v495 = vpack.c.b16 %v481, %v480
        %v496 = vpack.c.b16 %v483, %v482
        %v497 = vpack.c.b16 %v485, %v484
        %v498 = vpack.c.b16 %v487, %v486
        %v499 = vpack.c.b16 %v489, %v488
        %v500 = vpack.c.b16 %v491, %v490
        %v501 = vpack.c.b16 %v493, %v492
        %510 = vmatprep.subr.bf16.mxu0 0
        %511 = vmatpush1.bf16.msra.mxu0 %v494
        %512 = vmatprep.subr.bf16.mxu0 0
        %513 = vmatpush1.bf16.msra.mxu0 %v495
        %514 = vmatprep.subr.bf16.mxu0 0
        %515 = vmatpush1.bf16.msra.mxu0 %v496
        %516 = vmatprep.subr.bf16.mxu0 0
        %517 = vmatpush1.bf16.msra.mxu0 %v497
        %518 = vmatprep.subr.bf16.mxu0 0
        %519 = vmatpush1.bf16.msra.mxu0 %v498
        %520 = vmatprep.subr.bf16.mxu0 0
        %521 = vmatpush1.bf16.msra.mxu0 %v499
        %522 = vmatprep.subr.bf16.mxu0 0
        %523 = vmatpush1.bf16.msra.mxu0 %v500
        %524 = vmatprep.subr.bf16.mxu0 0
        %525 = vmatpush1.bf16.msra.mxu0 %v501
        %526 = vmatprep.subr.bf16.mxu0 0
        %527 = vmatpush1.bf16.msra.mxu0 0
        %528 = vmatprep.subr.bf16.mxu0 0
        %529 = vmatpush1.bf16.msra.mxu0 0
        %530 = vmatprep.subr.bf16.mxu0 0
        %531 = vmatpush1.bf16.msra.mxu0 0
        %532 = vmatprep.subr.bf16.mxu0 0
        %533 = vmatpush1.bf16.msra.mxu0 0
        %534 = vmatprep.subr.bf16.mxu0 0
        %535 = vmatpush1.bf16.msra.mxu0 0
        %536 = vmatprep.subr.bf16.mxu0 0
        %537 = vmatpush1.bf16.msra.mxu0 0
        %538 = vmatprep.subr.bf16.mxu0 0
        %539 = vmatpush1.bf16.msra.mxu0 0
        %540 = vmatprep.subr.bf16.mxu0 0
        %541 = vmatpush1.bf16.msra.mxu0 0
        %542 = vmatprep.mubr.bf16.mxu0 0
        %543 = vmatmul.mubr.bf16.gmra.mrb[0].mxu0 %v324
        %v544 = vpop.f32.mrb[0].mxu0
        %v545 = vadd.f32 %v456, %v544
        %v546 = vpop.f32.mrb[0].mxu0
        %v547 = vpop.f32.mrb[0].mxu0
        %v548 = vadd.f32 %v459, %v547
        %v549 = vpop.f32.mrb[0].mxu0
        %550 = vdwg.mxu0
        %s551 = scalar_lea.vmem [#allocation7], 128
        %v552 = vld [vmem:[%s551] sm:$0xf]
        %v553 = vld [vmem:[%s551 + $0x4] sm:$0xf]
        %v554 = vld [vmem:[%s551 + $0x8] sm:$0xf]
        %v555 = vld [vmem:[%s551 + $0xc] sm:$0xf]
        %v556 = vld [vmem:[%s551 + $0x10] sm:$0xf]
        %v557 = vld [vmem:[%s551 + $0x14] sm:$0xf]
        %v558 = vld [vmem:[%s551 + $0x18] sm:$0xf]
        %v559 = vld [vmem:[%s551 + $0x1c] sm:$0xf]
        %v560 = vld [vmem:[%s551 + $0x20] sm:$0xf]
        %v561 = vld [vmem:[%s551 + $0x24] sm:$0xf]
        %v562 = vld [vmem:[%s551 + $0x28] sm:$0xf]
        %v563 = vld [vmem:[%s551 + $0x2c] sm:$0xf]
        %v564 = vld [vmem:[%s551 + $0x30] sm:$0xf]
        %v565 = vld [vmem:[%s551 + $0x34] sm:$0xf]
        %v566 = vld [vmem:[%s551 + $0x38] sm:$0xf]
        %v567 = vld [vmem:[%s551 + $0x3c] sm:$0xf]
        %vm569 = vcmask 1046528
        %v570 = vrot.slane %v324, 1
        %v571 = vrot.slane %v319, 1
        %v572 = vsel %vm569, %v570, %v571
        %v590 = vunpack.c.l.b16 %v552
        %v591 = vunpack.c.l.b16 %v553
        %v592 = vunpack.c.l.b16 %v554
        %v593 = vunpack.c.l.b16 %v555
        %v594 = vunpack.c.l.b16 %v556
        %v595 = vunpack.c.l.b16 %v557
        %v596 = vunpack.c.l.b16 %v558
        %v597 = vunpack.c.l.b16 %v559
        %v598 = vunpack.c.l.b16 %v560
        %v599 = vunpack.c.l.b16 %v561
        %v600 = vunpack.c.l.b16 %v562
        %v601 = vunpack.c.l.b16 %v563
        %v602 = vunpack.c.l.b16 %v564
        %v603 = vunpack.c.l.b16 %v565
        %v604 = vunpack.c.l.b16 %v566
        %v605 = vunpack.c.l.b16 %v567
        %v606 = vpack.c.b16 %v591, %v590
        %v607 = vpack.c.b16 %v593, %v592
        %v608 = vpack.c.b16 %v595, %v594
        %v609 = vpack.c.b16 %v597, %v596
        %v610 = vpack.c.b16 %v599, %v598
        %v611 = vpack.c.b16 %v601, %v600
        %v612 = vpack.c.b16 %v603, %v602
        %v613 = vpack.c.b16 %v605, %v604
        %622 = vmatprep.subr.bf16.mxu0 0
        %623 = vmatpush1.bf16.msra.mxu0 %v606
        %624 = vmatprep.subr.bf16.mxu0 0
        %625 = vmatpush1.bf16.msra.mxu0 %v607
        %626 = vmatprep.subr.bf16.mxu0 0
        %627 = vmatpush1.bf16.msra.mxu0 %v608
        %628 = vmatprep.subr.bf16.mxu0 0
        %629 = vmatpush1.bf16.msra.mxu0 %v609
        %630 = vmatprep.subr.bf16.mxu0 0
        %631 = vmatpush1.bf16.msra.mxu0 %v610
        %632 = vmatprep.subr.bf16.mxu0 0
        %633 = vmatpush1.bf16.msra.mxu0 %v611
        %634 = vmatprep.subr.bf16.mxu0 0
        %635 = vmatpush1.bf16.msra.mxu0 %v612
        %636 = vmatprep.subr.bf16.mxu0 0
        %637 = vmatpush1.bf16.msra.mxu0 %v613
        %638 = vmatprep.subr.bf16.mxu0 0
        %639 = vmatpush1.bf16.msra.mxu0 0
        %640 = vmatprep.subr.bf16.mxu0 0
        %641 = vmatpush1.bf16.msra.mxu0 0
        %642 = vmatprep.subr.bf16.mxu0 0
        %643 = vmatpush1.bf16.msra.mxu0 0
        %644 = vmatprep.subr.bf16.mxu0 0
        %645 = vmatpush1.bf16.msra.mxu0 0
        %646 = vmatprep.subr.bf16.mxu0 0
        %647 = vmatpush1.bf16.msra.mxu0 0
        %648 = vmatprep.subr.bf16.mxu0 0
        %649 = vmatpush1.bf16.msra.mxu0 0
        %650 = vmatprep.subr.bf16.mxu0 0
        %651 = vmatpush1.bf16.msra.mxu0 0
        %652 = vmatprep.subr.bf16.mxu0 0
        %653 = vmatpush1.bf16.msra.mxu0 0
        %654 = vmatprep.mubr.bf16.mxu0 0
        %655 = vmatmul.mubr.bf16.gmra.mrb[0].mxu0 %v572
        %v656 = vpop.f32.mrb[0].mxu0
        %v657 = vadd.f32 0.0, %v656
        %v658 = vpop.f32.mrb[0].mxu0
        %v659 = vpop.f32.mrb[0].mxu0
        %v660 = vadd.f32 0.0, %v659
        %v661 = vpop.f32.mrb[0].mxu0
        %662 = vdwg.mxu0
        %v663 = vadd.f32 %v545, %v657
        %v664 = vadd.f32 %v548, %v660
        %v665 = vld [vmem:[%s3] sm:$0x1]
        %v667 = vlaneseq
        %v668 = vshrl.u32 %v667, 7
        %v669 = vsub.s32 0, %v668
        %v670 = vrot.slane %v665, %v669
        %v672 = vadd.f32 %v663, %v670
        %v673 = vadd.f32 %v664, %v670
        %v674 = vmax.f32 %v672, 0.0
        %v675 = vmax.f32 %v673, 0.0
        %v676 = vpack.c.bf16 %v675, %v674
        %v678 = vunpack.c.l.b16 %v676
        %v679 = vunpack.c.h.b16 %v676
        %v680 = vpack.c.b16 %v678, %v678
        %v681 = vpack.c.b16 %v679, %v679
        %684 = vst [vmem:[%s311] sm:$0xf] %v680
        %685 = vst [vmem:[%s311 + $0x4] sm:$0xf] %v681
        %s686 = sand.u32 %s159, 1
        %s687 = scalar_lea.sflag [#allocation4], %s686
        %s688 = sand.u32 %s159, 1
        %s689 = smul.addr %s688, 8
        %s690 = scalar_lea.vmem [#allocation8], %s689
        // Predicated region
        $region49: #{tpu_custom_call.1} parent=35 // pred_check
          %p691 = pneg %p169
        $region50: #{tpu_custom_call.1} parent=35 // pred_check_branch
          %693 = sbr.rel (%p691) target = $region52
        $region51: #{tpu_custom_call.1} parent=35 // pred_region
          %s694 = smul.u32 2, %s30
          %s696 = ssub.s32 128, 128
          %697 = vsyncadd %s687, %s696
          %s698 = sadd.s32 %s31, %s694
          %s699 = smul.addr %s29, 2
          %s700 = sadd.s32 %s698, %s699
          %s701 = smul.addr %s700, 64
          %s702 = scalar_lea.hbm %s4, %s701
          %s703 = sshll.u32 %s690, 4
          %s704 = int_to_ptr.vmem [resolvable:$true] %s703
          %709 = dma.vmem_to_hbm [thread:$0]  %s704, 128, %s702, %s687, 64, 64, 4
        $region52: #{tpu_custom_call.1} parent=35 // pred_fallthru
          _
      $region36: #{tpu_custom_call.1} parent=5 // pred_fallthru
        _
      %p710 = scmp.le.s32.totalorder 2, %s19
      // Predicated region
      $region53: #{tpu_custom_call.1} parent=5 // pred_check
        %p711 = pneg %p710
      $region54: #{tpu_custom_call.1} parent=5 // pred_check_branch
        %713 = sbr.rel (%p711) target = $region56
      $region55: #{tpu_custom_call.1} parent=5 // pred_region
        %s714 = ssub.s32 %s19, 2
        // Predicated region
        $region57: #{tpu_custom_call.1} parent=55 // pred_check
          %p715 = pneg %p175
        $region58: #{tpu_custom_call.1} parent=55 // pred_check_branch
          %717 = sbr.rel (%p715) target = $region60
        $region59: #{tpu_custom_call.1} parent=55 // pred_region
          %s718 = sand.u32 %s160, 1
          %s719 = scalar_lea.sflag [#allocation4], %s718
          %s720 = sand.u32 %s160, 1
          %s721 = smul.addr %s720, 8
          %s722 = scalar_lea.vmem [#allocation8], %s721
          %723 = dma.done %s719, 128
        $region60: #{tpu_custom_call.1} parent=55 // pred_fallthru
          _
      $region56: #{tpu_custom_call.1} parent=5 // pred_fallthru
        _
    $region6: #{tpu_custom_call.1} parent=1 // loop_footer
      %s23 = sadd.s32 1, %s19
    $region7: #{tpu_custom_call.1} parent=1 // loop_footer_branch
      %18 = sbr.rel target = $region3
    $region8: #{tpu_custom_call.1} parent=1 // loop_exit
      _
    %724 = vsyncpa [#allocation3], 1
    %s725 = scalar_lea.sflag [#allocation3], 1
    %726 = vsyncpa %s725, 1
    %727 = vsyncpa [#allocation6], 1
    %s728 = scalar_lea.sflag [#allocation6], 1
    %729 = vsyncpa %s728, 1
    %730 = vsyncpa [#allocation4], 1
    %s731 = scalar_lea.sflag [#allocation4], 1
    %732 = vsyncpa %s731, 1

</llo_original>
